<compile_context>
chip_gen: v7x
topology: tpu7x:2x2x1
jax: 0.10.0
libtpu: 0.0.40
codegen_flags: <defaults>
</compile_context>

<pallas_src>
import jax
import jax.numpy as jnp
import numpy as np
from jax import lax
from jax.experimental import pallas as pl
from jax.experimental.pallas import tpu as pltpu


TILE_N = 8  # batch-tile size == sublane count


def _round_up(x, m):
    return ((x + m - 1) // m) * m


# --------------------------------------------------------------------------
# Pallas kernel: in-kernel embedding gather + whole RNN rollout per batch tile.
# --------------------------------------------------------------------------
def _make_rnn_kernel(seq_len, tile_n, unroll):
    def kernel(ids_ref, emb_ref, whh_ref, out_ref, p_ref):
        """ids_ref: (N_pad, S) int32 in SMEM (scalar prefetch)
           emb_ref: (V, Hp)  f32  VMEM-resident pre-projected table (x@W_ih^T + b)
           whh_ref: (Hp, Hp) f32  VMEM-resident W_hh^T
           out_ref: (tile_n, Hp)  final hidden state for this batch tile
           p_ref:   (S, tile_n, Hp) VMEM scratch, time-major gathered inputs."""
        base = pl.program_id(0) * tile_n

        # 1) Gather the pre-projected inputs for this batch tile:
        #    p_ref[t, r, :] = emb_proj[ids[base + r, t]]
        #    Static (t, r) loops unroll at trace time; only the row index is dynamic.
        # TODO(synk): at production vocab / seq sizes, keep emb_proj in HBM
        # (memory_space=pl.ANY) and replace this with a double-buffered DMA gather,
        # tiling S so the scratch fits VMEM.
        for t in range(seq_len):
            for r in range(tile_n):
                idx = ids_ref[base + r, t]
                p_ref[t, r:r + 1, :] = emb_ref[pl.ds(idx, 1), :]

        # 2) Recurrence.  h0 == 0, so the first step needs no recurrent matmul.
        w_hh = whh_ref[...]                    # hoisted; resident across the loop
        h1 = jnp.tanh(p_ref[0])

        def step(t, h):
            # Only the HxH matmul + tanh sit on the serial dependency chain.
            return jnp.tanh(
                p_ref[t] + jnp.dot(h, w_hh, preferred_element_type=jnp.float32))

        h_final = lax.fori_loop(1, seq_len, step, h1, unroll=unroll)
        out_ref[...] = h_final.astype(out_ref.dtype)

    return kernel


def rnn_final_hidden(input_ids, emb_proj, w_hh_t, *, tile_n=TILE_N):
    """input_ids: (N, S) int32; emb_proj: (V, Hp) f32 (projection+bias folded);
       w_hh_t: (Hp, Hp) f32.  Returns (N, Hp) final hidden states."""
    N, S = input_ids.shape
    V, Hp = emb_proj.shape

    # Pad batch rows to a multiple of 8 sublanes (padded rows use a valid id and
    # are sliced off afterwards).
    n_pad = _round_up(N, tile_n)
    if n_pad != N:
        input_ids = jnp.concatenate(
            [input_ids, jnp.zeros((n_pad - N, S), input_ids.dtype)], axis=0)

    unroll = True if S <= 16 else 8   # full unroll only for short sequences

    out = pl.pallas_call(
        _make_rnn_kernel(S, tile_n, unroll),
        out_shape=jax.ShapeDtypeStruct((n_pad, Hp), jnp.float32),
        grid_spec=pltpu.PrefetchScalarGridSpec(
            num_scalar_prefetch=1,                   # input_ids -> SMEM
            grid=(n_pad // tile_n,),                 # batch tiles (independent)
            in_specs=[
                pl.BlockSpec((V, Hp), lambda i, ids: (0, 0)),    # emb_proj resident
                pl.BlockSpec((Hp, Hp), lambda i, ids: (0, 0)),   # W_hh^T resident
            ],
            out_specs=pl.BlockSpec((tile_n, Hp), lambda i, ids: (i, 0)),
            scratch_shapes=[pltpu.VMEM((S, tile_n, Hp), jnp.float32)],
        ),
        compiler_params=pltpu.CompilerParams(
            dimension_semantics=("parallel",),       # megacore-shardable batch axis
            vmem_limit_bytes=32 * 1024 * 1024,       # safe on v5e/v6e/v7x at these sizes
        ),
    )(input_ids, emb_proj, w_hh_t)
    return out[:N]


# --------------------------------------------------------------------------
# SiameseNetwork wrapper (parameters + forward / forward_pair)
# --------------------------------------------------------------------------
class SiameseNetworkPallas:
    def __init__(self, vocab_size, embedding_dim, hidden_dim, projection_dim, pad_idx, key):
        self.pad_idx = pad_idx
        self.hidden_dim = hidden_dim
        k_emb, k_wih, k_whh, k_bih, k_bhh = jax.random.split(key, 5)

        # nn.Embedding: N(0,1) init, padding_idx row zeroed.
        emb = jax.random.normal(k_emb, (vocab_size, embedding_dim), dtype=jnp.float32)
        self.embedding = emb.at[pad_idx].set(0.0)

        # nn.RNN params: uniform(-1/sqrt(H), 1/sqrt(H)) init.
        bound = 1.0 / np.sqrt(hidden_dim)
        u = lambda k, shape: jax.random.uniform(
            k, shape, minval=-bound, maxval=bound, dtype=jnp.float32)
        w_ih = u(k_wih, (hidden_dim, embedding_dim))   # PyTorch weight_ih_l0
        w_hh = u(k_whh, (hidden_dim, hidden_dim))      # PyTorch weight_hh_l0
        b_ih = u(k_bih, (hidden_dim,))
        b_hh = u(k_bhh, (hidden_dim,))

        # Kept (unpadded) for the pure-JAX reference.
        self.w_ih_t = w_ih.T                           # (E, H)
        self.w_hh_t = w_hh.T                           # (H, H)
        self.bias = b_ih + b_hh                        # (H,)

        # Fold the input projection + bias into the embedding table once:
        #   emb_proj[v] = embedding[v] @ W_ih^T + (b_ih + b_hh)
        # (padding row: 0 @ W_ih^T + b == b, identical to x_t = 0 in the reference)
        emb_proj = self.embedding @ self.w_ih_t + self.bias           # (vocab, H)

        # Lane-pad the hidden dim to a multiple of 128 with zeros.  Zero columns
        # of emb_proj and zero rows/cols of W_hh^T keep the padded hidden units
        # exactly 0 through tanh, so the first H columns are bit-identical math.
        self.h_pad = _round_up(hidden_dim, 128)
        self.emb_proj_p = (
            jnp.zeros((vocab_size, self.h_pad), jnp.float32)
            .at[:, :hidden_dim].set(emb_proj))
        self.w_hh_t_p = (
            jnp.zeros((self.h_pad, self.h_pad), jnp.float32)
            .at[:hidden_dim, :hidden_dim].set(self.w_hh_t))

    def _run(self, input_ids):
        # input_ids: (N, S) int -> (N, H) float32
        h = rnn_final_hidden(input_ids.astype(jnp.int32),
                             self.emb_proj_p, self.w_hh_t_p)
        return h[:, :self.hidden_dim]

    def forward(self, input_ids):
        return self._run(input_ids)

    def forward_pair(self, input_ids_1, input_ids_2):
        # Fuse both Siamese branches into a single kernel launch (B -> 2B rows,
        # padded to 8 sublanes inside rnn_final_hidden).
        B = input_ids_1.shape[0]
        ids = jnp.concatenate([input_ids_1, input_ids_2], axis=0)   # (2B, S)
        h = self._run(ids)                                          # (2B, H)
        return h[:B], h[B:]


# --------------------------------------------------------------------------
# Pure-JAX reference (PyTorch semantics) for correctness check
# --------------------------------------------------------------------------
def reference_forward(model, input_ids):
    embedded = model.embedding[input_ids]              # (B, S, E)
    B, S, E = embedded.shape
    H = model.w_hh_t.shape[0]

    def step(h, x_t):
        h_new = jnp.tanh(x_t @ model.w_ih_t + h @ model.w_hh_t + model.bias)
        return h_new, None

    h0 = jnp.zeros((B, H), dtype=jnp.float32)
    h_final, _ = lax.scan(step, h0, jnp.transpose(embedded, (1, 0, 2)))
    return h_final


# --------------------------------------------------------------------------
if __name__ == "__main__":
    vocab_size, embedding_dim, hidden_dim, projection_dim, pad_idx = 50, 32, 32, 16, 0
    batch, seq = 2, 8

    key = jax.random.PRNGKey(0)
    k_model, k_ids1, k_ids2 = jax.random.split(key, 3)

    model = SiameseNetworkPallas(
        vocab_size, embedding_dim, hidden_dim, projection_dim, pad_idx, k_model)

    input_ids_1 = jax.random.randint(k_ids1, (batch, seq), 0, vocab_size, dtype=jnp.int32)
    input_ids_2 = jax.random.randint(k_ids2, (batch, seq), 0, vocab_size, dtype=jnp.int32)
    # Include some padding tokens to exercise the padding_idx zero rows.
    input_ids_1 = input_ids_1.at[:, -2:].set(pad_idx)

    out1, out2 = model.forward_pair(input_ids_1, input_ids_2)
    out1 = jax.block_until_ready(out1)
    out2 = jax.block_until_ready(out2)

    # Single-branch forward path also exercised.
    single = jax.block_until_ready(model.forward(input_ids_1))

    ref1 = jax.block_until_ready(reference_forward(model, input_ids_1))
    ref2 = jax.block_until_ready(reference_forward(model, input_ids_2))

    np.testing.assert_allclose(np.asarray(out1), np.asarray(ref1), atol=2e-5, rtol=1e-5)
    np.testing.assert_allclose(np.asarray(out2), np.asarray(ref2), atol=2e-5, rtol=1e-5)
    np.testing.assert_allclose(np.asarray(single), np.asarray(ref1), atol=2e-5, rtol=1e-5)
    assert out1.shape == (batch, hidden_dim) and out2.shape == (batch, hidden_dim)

    print("KERNEL_OK")
</pallas_src>

<mosaic_0001>
module attributes {stable_mosaic.version = 11 : i64} {
  func.func @kernel(%arg0: i32, %arg1: memref<8x8xi32, #tpu.memory_space<smem>>, %arg2: memref<50x128xf32, #tpu.memory_space<vmem>>, %arg3: memref<128x128xf32, #tpu.memory_space<vmem>>, %arg4: memref<8x128xf32, #tpu.memory_space<vmem>>, %arg5: memref<8x8x128xf32, #tpu.memory_space<vmem>>) attributes {dimension_semantics = [#tpu.dimension_semantics<parallel>], iteration_bounds = array<i64: 1>, scalar_prefetch = 1 : i64, scratch_operands = 1 : i64, tpu.core_type = #tpu.core_type<tc>, window_params = [{pipeline_mode = #tpu.pipeline_mode<synchronous>, transform_indices = @transform_0, window_bounds = array<i64: 50, 128>}, {pipeline_mode = #tpu.pipeline_mode<synchronous>, transform_indices = @transform_1, window_bounds = array<i64: 128, 128>}, {transform_indices = @transform_2, window_bounds = array<i64: 8, 128>}]} {
    %c8_i32 = arith.constant 8 : i32
    %0 = arith.muli %arg0, %c8_i32 : i32
    %c0_i32 = arith.constant 0 : i32
    %1 = arith.addi %0, %c0_i32 : i32
    %2 = arith.index_cast %1 : i32 to index
    %c0 = arith.constant 0 : index
    %3 = memref.load %arg1[%2, %c0] : memref<8x8xi32, #tpu.memory_space<smem>>
    %4 = arith.index_cast %3 : i32 to index
    %c0_0 = arith.constant 0 : index
    %5 = vector.load %arg2[%4, %c0_0] : memref<50x128xf32, #tpu.memory_space<vmem>>, vector<1x128xf32>
    %c0_1 = arith.constant 0 : index
    %c0_2 = arith.constant 0 : index
    %c0_3 = arith.constant 0 : index
    %6 = vector.load %arg5[%c0_1, %c0_2, %c0_3] : memref<8x8x128xf32, #tpu.memory_space<vmem>>, vector<1x1x128xf32>
    %7 = vector.shape_cast %6 : vector<1x1x128xf32> to vector<1x128xf32>
    %8 = vector.shape_cast %5 : vector<1x128xf32> to vector<1x1x128xf32>
    tpu.vector_store %arg5[%c0_1, %c0_2, %c0_3], %8 {strides = array<i32>} : memref<8x8x128xf32, #tpu.memory_space<vmem>>, vector<1x1x128xf32>,
    %c1_i32 = arith.constant 1 : i32
    %9 = arith.addi %0, %c1_i32 : i32
    %10 = arith.index_cast %9 : i32 to index
    %c0_4 = arith.constant 0 : index
    %11 = memref.load %arg1[%10, %c0_4] : memref<8x8xi32, #tpu.memory_space<smem>>
    %12 = arith.index_cast %11 : i32 to index
    %c0_5 = arith.constant 0 : index
    %13 = vector.load %arg2[%12, %c0_5] : memref<50x128xf32, #tpu.memory_space<vmem>>, vector<1x128xf32>
    %c0_6 = arith.constant 0 : index
    %c1 = arith.constant 1 : index
    %c0_7 = arith.constant 0 : index
    %14 = vector.load %arg5[%c0_6, %c1, %c0_7] : memref<8x8x128xf32, #tpu.memory_space<vmem>>, vector<1x1x128xf32>
    %15 = vector.shape_cast %14 : vector<1x1x128xf32> to vector<1x128xf32>
    %16 = vector.shape_cast %13 : vector<1x128xf32> to vector<1x1x128xf32>
    tpu.vector_store %arg5[%c0_6, %c1, %c0_7], %16 {strides = array<i32>} : memref<8x8x128xf32, #tpu.memory_space<vmem>>, vector<1x1x128xf32>,
    %c2_i32 = arith.constant 2 : i32
    %17 = arith.addi %0, %c2_i32 : i32
    %18 = arith.index_cast %17 : i32 to index
    %c0_8 = arith.constant 0 : index
    %19 = memref.load %arg1[%18, %c0_8] : memref<8x8xi32, #tpu.memory_space<smem>>
    %20 = arith.index_cast %19 : i32 to index
    %c0_9 = arith.constant 0 : index
    %21 = vector.load %arg2[%20, %c0_9] : memref<50x128xf32, #tpu.memory_space<vmem>>, vector<1x128xf32>
    %c0_10 = arith.constant 0 : index
    %c2 = arith.constant 2 : index
    %c0_11 = arith.constant 0 : index
    %22 = vector.load %arg5[%c0_10, %c2, %c0_11] : memref<8x8x128xf32, #tpu.memory_space<vmem>>, vector<1x1x128xf32>
    %23 = vector.shape_cast %22 : vector<1x1x128xf32> to vector<1x128xf32>
    %24 = vector.shape_cast %21 : vector<1x128xf32> to vector<1x1x128xf32>
    tpu.vector_store %arg5[%c0_10, %c2, %c0_11], %24 {strides = array<i32>} : memref<8x8x128xf32, #tpu.memory_space<vmem>>, vector<1x1x128xf32>,
    %c3_i32 = arith.constant 3 : i32
    %25 = arith.addi %0, %c3_i32 : i32
    %26 = arith.index_cast %25 : i32 to index
    %c0_12 = arith.constant 0 : index
    %27 = memref.load %arg1[%26, %c0_12] : memref<8x8xi32, #tpu.memory_space<smem>>
    %28 = arith.index_cast %27 : i32 to index
    %c0_13 = arith.constant 0 : index
    %29 = vector.load %arg2[%28, %c0_13] : memref<50x128xf32, #tpu.memory_space<vmem>>, vector<1x128xf32>
    %c0_14 = arith.constant 0 : index
    %c3 = arith.constant 3 : index
    %c0_15 = arith.constant 0 : index
    %30 = vector.load %arg5[%c0_14, %c3, %c0_15] : memref<8x8x128xf32, #tpu.memory_space<vmem>>, vector<1x1x128xf32>
    %31 = vector.shape_cast %30 : vector<1x1x128xf32> to vector<1x128xf32>
    %32 = vector.shape_cast %29 : vector<1x128xf32> to vector<1x1x128xf32>
    tpu.vector_store %arg5[%c0_14, %c3, %c0_15], %32 {strides = array<i32>} : memref<8x8x128xf32, #tpu.memory_space<vmem>>, vector<1x1x128xf32>,
    %c4_i32 = arith.constant 4 : i32
    %33 = arith.addi %0, %c4_i32 : i32
    %34 = arith.index_cast %33 : i32 to index
    %c0_16 = arith.constant 0 : index
    %35 = memref.load %arg1[%34, %c0_16] : memref<8x8xi32, #tpu.memory_space<smem>>
    %36 = arith.index_cast %35 : i32 to index
    %c0_17 = arith.constant 0 : index
    %37 = vector.load %arg2[%36, %c0_17] : memref<50x128xf32, #tpu.memory_space<vmem>>, vector<1x128xf32>
    %c0_18 = arith.constant 0 : index
    %c4 = arith.constant 4 : index
    %c0_19 = arith.constant 0 : index
    %38 = vector.load %arg5[%c0_18, %c4, %c0_19] : memref<8x8x128xf32, #tpu.memory_space<vmem>>, vector<1x1x128xf32>
    %39 = vector.shape_cast %38 : vector<1x1x128xf32> to vector<1x128xf32>
    %40 = vector.shape_cast %37 : vector<1x128xf32> to vector<1x1x128xf32>
    tpu.vector_store %arg5[%c0_18, %c4, %c0_19], %40 {strides = array<i32>} : memref<8x8x128xf32, #tpu.memory_space<vmem>>, vector<1x1x128xf32>,
    %c5_i32 = arith.constant 5 : i32
    %41 = arith.addi %0, %c5_i32 : i32
    %42 = arith.index_cast %41 : i32 to index
    %c0_20 = arith.constant 0 : index
    %43 = memref.load %arg1[%42, %c0_20] : memref<8x8xi32, #tpu.memory_space<smem>>
    %44 = arith.index_cast %43 : i32 to index
    %c0_21 = arith.constant 0 : index
    %45 = vector.load %arg2[%44, %c0_21] : memref<50x128xf32, #tpu.memory_space<vmem>>, vector<1x128xf32>
    %c0_22 = arith.constant 0 : index
    %c5 = arith.constant 5 : index
    %c0_23 = arith.constant 0 : index
    %46 = vector.load %arg5[%c0_22, %c5, %c0_23] : memref<8x8x128xf32, #tpu.memory_space<vmem>>, vector<1x1x128xf32>
    %47 = vector.shape_cast %46 : vector<1x1x128xf32> to vector<1x128xf32>
    %48 = vector.shape_cast %45 : vector<1x128xf32> to vector<1x1x128xf32>
    tpu.vector_store %arg5[%c0_22, %c5, %c0_23], %48 {strides = array<i32>} : memref<8x8x128xf32, #tpu.memory_space<vmem>>, vector<1x1x128xf32>,
    %c6_i32 = arith.constant 6 : i32
    %49 = arith.addi %0, %c6_i32 : i32
    %50 = arith.index_cast %49 : i32 to index
    %c0_24 = arith.constant 0 : index
    %51 = memref.load %arg1[%50, %c0_24] : memref<8x8xi32, #tpu.memory_space<smem>>
    %52 = arith.index_cast %51 : i32 to index
    %c0_25 = arith.constant 0 : index
    %53 = vector.load %arg2[%52, %c0_25] : memref<50x128xf32, #tpu.memory_space<vmem>>, vector<1x128xf32>
    %c0_26 = arith.constant 0 : index
    %c6 = arith.constant 6 : index
    %c0_27 = arith.constant 0 : index
    %54 = vector.load %arg5[%c0_26, %c6, %c0_27] : memref<8x8x128xf32, #tpu.memory_space<vmem>>, vector<1x1x128xf32>
    %55 = vector.shape_cast %54 : vector<1x1x128xf32> to vector<1x128xf32>
    %56 = vector.shape_cast %53 : vector<1x128xf32> to vector<1x1x128xf32>
    tpu.vector_store %arg5[%c0_26, %c6, %c0_27], %56 {strides = array<i32>} : memref<8x8x128xf32, #tpu.memory_space<vmem>>, vector<1x1x128xf32>,
    %c7_i32 = arith.constant 7 : i32
    %57 = arith.addi %0, %c7_i32 : i32
    %58 = arith.index_cast %57 : i32 to index
    %c0_28 = arith.constant 0 : index
    %59 = memref.load %arg1[%58, %c0_28] : memref<8x8xi32, #tpu.memory_space<smem>>
    %60 = arith.index_cast %59 : i32 to index
    %c0_29 = arith.constant 0 : index
    %61 = vector.load %arg2[%60, %c0_29] : memref<50x128xf32, #tpu.memory_space<vmem>>, vector<1x128xf32>
    %c0_30 = arith.constant 0 : index
    %c7 = arith.constant 7 : index
    %c0_31 = arith.constant 0 : index
    %62 = vector.load %arg5[%c0_30, %c7, %c0_31] : memref<8x8x128xf32, #tpu.memory_space<vmem>>, vector<1x1x128xf32>
    %63 = vector.shape_cast %62 : vector<1x1x128xf32> to vector<1x128xf32>
    %64 = vector.shape_cast %61 : vector<1x128xf32> to vector<1x1x128xf32>
    tpu.vector_store %arg5[%c0_30, %c7, %c0_31], %64 {strides = array<i32>} : memref<8x8x128xf32, #tpu.memory_space<vmem>>, vector<1x1x128xf32>,
    %c0_i32_32 = arith.constant 0 : i32
    %65 = arith.addi %0, %c0_i32_32 : i32
    %66 = arith.index_cast %65 : i32 to index
    %c1_33 = arith.constant 1 : index
    %67 = memref.load %arg1[%66, %c1_33] : memref<8x8xi32, #tpu.memory_space<smem>>
    %68 = arith.index_cast %67 : i32 to index
    %c0_34 = arith.constant 0 : index
    %69 = vector.load %arg2[%68, %c0_34] : memref<50x128xf32, #tpu.memory_space<vmem>>, vector<1x128xf32>
    %c1_35 = arith.constant 1 : index
    %c0_36 = arith.constant 0 : index
    %c0_37 = arith.constant 0 : index
    %70 = vector.load %arg5[%c1_35, %c0_36, %c0_37] : memref<8x8x128xf32, #tpu.memory_space<vmem>>, vector<1x1x128xf32>
    %71 = vector.shape_cast %70 : vector<1x1x128xf32> to vector<1x128xf32>
    %72 = vector.shape_cast %69 : vector<1x128xf32> to vector<1x1x128xf32>
    tpu.vector_store %arg5[%c1_35, %c0_36, %c0_37], %72 {strides = array<i32>} : memref<8x8x128xf32, #tpu.memory_space<vmem>>, vector<1x1x128xf32>,
    %c1_i32_38 = arith.constant 1 : i32
    %73 = arith.addi %0, %c1_i32_38 : i32
    %74 = arith.index_cast %73 : i32 to index
    %c1_39 = arith.constant 1 : index
    %75 = memref.load %arg1[%74, %c1_39] : memref<8x8xi32, #tpu.memory_space<smem>>
    %76 = arith.index_cast %75 : i32 to index
    %c0_40 = arith.constant 0 : index
    %77 = vector.load %arg2[%76, %c0_40] : memref<50x128xf32, #tpu.memory_space<vmem>>, vector<1x128xf32>
    %c1_41 = arith.constant 1 : index
    %c1_42 = arith.constant 1 : index
    %c0_43 = arith.constant 0 : index
    %78 = vector.load %arg5[%c1_41, %c1_42, %c0_43] : memref<8x8x128xf32, #tpu.memory_space<vmem>>, vector<1x1x128xf32>
    %79 = vector.shape_cast %78 : vector<1x1x128xf32> to vector<1x128xf32>
    %80 = vector.shape_cast %77 : vector<1x128xf32> to vector<1x1x128xf32>
    tpu.vector_store %arg5[%c1_41, %c1_42, %c0_43], %80 {strides = array<i32>} : memref<8x8x128xf32, #tpu.memory_space<vmem>>, vector<1x1x128xf32>,
    %c2_i32_44 = arith.constant 2 : i32
    %81 = arith.addi %0, %c2_i32_44 : i32
    %82 = arith.index_cast %81 : i32 to index
    %c1_45 = arith.constant 1 : index
    %83 = memref.load %arg1[%82, %c1_45] : memref<8x8xi32, #tpu.memory_space<smem>>
    %84 = arith.index_cast %83 : i32 to index
    %c0_46 = arith.constant 0 : index
    %85 = vector.load %arg2[%84, %c0_46] : memref<50x128xf32, #tpu.memory_space<vmem>>, vector<1x128xf32>
    %c1_47 = arith.constant 1 : index
    %c2_48 = arith.constant 2 : index
    %c0_49 = arith.constant 0 : index
    %86 = vector.load %arg5[%c1_47, %c2_48, %c0_49] : memref<8x8x128xf32, #tpu.memory_space<vmem>>, vector<1x1x128xf32>
    %87 = vector.shape_cast %86 : vector<1x1x128xf32> to vector<1x128xf32>
    %88 = vector.shape_cast %85 : vector<1x128xf32> to vector<1x1x128xf32>
    tpu.vector_store %arg5[%c1_47, %c2_48, %c0_49], %88 {strides = array<i32>} : memref<8x8x128xf32, #tpu.memory_space<vmem>>, vector<1x1x128xf32>,
    %c3_i32_50 = arith.constant 3 : i32
    %89 = arith.addi %0, %c3_i32_50 : i32
    %90 = arith.index_cast %89 : i32 to index
    %c1_51 = arith.constant 1 : index
    %91 = memref.load %arg1[%90, %c1_51] : memref<8x8xi32, #tpu.memory_space<smem>>
    %92 = arith.index_cast %91 : i32 to index
    %c0_52 = arith.constant 0 : index
    %93 = vector.load %arg2[%92, %c0_52] : memref<50x128xf32, #tpu.memory_space<vmem>>, vector<1x128xf32>
    %c1_53 = arith.constant 1 : index
    %c3_54 = arith.constant 3 : index
    %c0_55 = arith.constant 0 : index
    %94 = vector.load %arg5[%c1_53, %c3_54, %c0_55] : memref<8x8x128xf32, #tpu.memory_space<vmem>>, vector<1x1x128xf32>
    %95 = vector.shape_cast %94 : vector<1x1x128xf32> to vector<1x128xf32>
    %96 = vector.shape_cast %93 : vector<1x128xf32> to vector<1x1x128xf32>
    tpu.vector_store %arg5[%c1_53, %c3_54, %c0_55], %96 {strides = array<i32>} : memref<8x8x128xf32, #tpu.memory_space<vmem>>, vector<1x1x128xf32>,
    %c4_i32_56 = arith.constant 4 : i32
    %97 = arith.addi %0, %c4_i32_56 : i32
    %98 = arith.index_cast %97 : i32 to index
    %c1_57 = arith.constant 1 : index
    %99 = memref.load %arg1[%98, %c1_57] : memref<8x8xi32, #tpu.memory_space<smem>>
    %100 = arith.index_cast %99 : i32 to index
    %c0_58 = arith.constant 0 : index
    %101 = vector.load %arg2[%100, %c0_58] : memref<50x128xf32, #tpu.memory_space<vmem>>, vector<1x128xf32>
    %c1_59 = arith.constant 1 : index
    %c4_60 = arith.constant 4 : index
    %c0_61 = arith.constant 0 : index
    %102 = vector.load %arg5[%c1_59, %c4_60, %c0_61] : memref<8x8x128xf32, #tpu.memory_space<vmem>>, vector<1x1x128xf32>
    %103 = vector.shape_cast %102 : vector<1x1x128xf32> to vector<1x128xf32>
    %104 = vector.shape_cast %101 : vector<1x128xf32> to vector<1x1x128xf32>
    tpu.vector_store %arg5[%c1_59, %c4_60, %c0_61], %104 {strides = array<i32>} : memref<8x8x128xf32, #tpu.memory_space<vmem>>, vector<1x1x128xf32>,
    %c5_i32_62 = arith.constant 5 : i32
    %105 = arith.addi %0, %c5_i32_62 : i32
    %106 = arith.index_cast %105 : i32 to index
    %c1_63 = arith.constant 1 : index
    %107 = memref.load %arg1[%106, %c1_63] : memref<8x8xi32, #tpu.memory_space<smem>>
    %108 = arith.index_cast %107 : i32 to index
    %c0_64 = arith.constant 0 : index
    %109 = vector.load %arg2[%108, %c0_64] : memref<50x128xf32, #tpu.memory_space<vmem>>, vector<1x128xf32>
    %c1_65 = arith.constant 1 : index
    %c5_66 = arith.constant 5 : index
    %c0_67 = arith.constant 0 : index
    %110 = vector.load %arg5[%c1_65, %c5_66, %c0_67] : memref<8x8x128xf32, #tpu.memory_space<vmem>>, vector<1x1x128xf32>
    %111 = vector.shape_cast %110 : vector<1x1x128xf32> to vector<1x128xf32>
    %112 = vector.shape_cast %109 : vector<1x128xf32> to vector<1x1x128xf32>
    tpu.vector_store %arg5[%c1_65, %c5_66, %c0_67], %112 {strides = array<i32>} : memref<8x8x128xf32, #tpu.memory_space<vmem>>, vector<1x1x128xf32>,
    %c6_i32_68 = arith.constant 6 : i32
    %113 = arith.addi %0, %c6_i32_68 : i32
    %114 = arith.index_cast %113 : i32 to index
    %c1_69 = arith.constant 1 : index
    %115 = memref.load %arg1[%114, %c1_69] : memref<8x8xi32, #tpu.memory_space<smem>>
    %116 = arith.index_cast %115 : i32 to index
    %c0_70 = arith.constant 0 : index
    %117 = vector.load %arg2[%116, %c0_70] : memref<50x128xf32, #tpu.memory_space<vmem>>, vector<1x128xf32>
    %c1_71 = arith.constant 1 : index
    %c6_72 = arith.constant 6 : index
    %c0_73 = arith.constant 0 : index
    %118 = vector.load %arg5[%c1_71, %c6_72, %c0_73] : memref<8x8x128xf32, #tpu.memory_space<vmem>>, vector<1x1x128xf32>
    %119 = vector.shape_cast %118 : vector<1x1x128xf32> to vector<1x128xf32>
    %120 = vector.shape_cast %117 : vector<1x128xf32> to vector<1x1x128xf32>
    tpu.vector_store %arg5[%c1_71, %c6_72, %c0_73], %120 {strides = array<i32>} : memref<8x8x128xf32, #tpu.memory_space<vmem>>, vector<1x1x128xf32>,
    %c7_i32_74 = arith.constant 7 : i32
    %121 = arith.addi %0, %c7_i32_74 : i32
    %122 = arith.index_cast %121 : i32 to index
    %c1_75 = arith.constant 1 : index
    %123 = memref.load %arg1[%122, %c1_75] : memref<8x8xi32, #tpu.memory_space<smem>>
    %124 = arith.index_cast %123 : i32 to index
    %c0_76 = arith.constant 0 : index
    %125 = vector.load %arg2[%124, %c0_76] : memref<50x128xf32, #tpu.memory_space<vmem>>, vector<1x128xf32>
    %c1_77 = arith.constant 1 : index
    %c7_78 = arith.constant 7 : index
    %c0_79 = arith.constant 0 : index
    %126 = vector.load %arg5[%c1_77, %c7_78, %c0_79] : memref<8x8x128xf32, #tpu.memory_space<vmem>>, vector<1x1x128xf32>
    %127 = vector.shape_cast %126 : vector<1x1x128xf32> to vector<1x128xf32>
    %128 = vector.shape_cast %125 : vector<1x128xf32> to vector<1x1x128xf32>
    tpu.vector_store %arg5[%c1_77, %c7_78, %c0_79], %128 {strides = array<i32>} : memref<8x8x128xf32, #tpu.memory_space<vmem>>, vector<1x1x128xf32>,
    %c0_i32_80 = arith.constant 0 : i32
    %129 = arith.addi %0, %c0_i32_80 : i32
    %130 = arith.index_cast %129 : i32 to index
    %c2_81 = arith.constant 2 : index
    %131 = memref.load %arg1[%130, %c2_81] : memref<8x8xi32, #tpu.memory_space<smem>>
    %132 = arith.index_cast %131 : i32 to index
    %c0_82 = arith.constant 0 : index
    %133 = vector.load %arg2[%132, %c0_82] : memref<50x128xf32, #tpu.memory_space<vmem>>, vector<1x128xf32>
    %c2_83 = arith.constant 2 : index
    %c0_84 = arith.constant 0 : index
    %c0_85 = arith.constant 0 : index
    %134 = vector.load %arg5[%c2_83, %c0_84, %c0_85] : memref<8x8x128xf32, #tpu.memory_space<vmem>>, vector<1x1x128xf32>
    %135 = vector.shape_cast %134 : vector<1x1x128xf32> to vector<1x128xf32>
    %136 = vector.shape_cast %133 : vector<1x128xf32> to vector<1x1x128xf32>
    tpu.vector_store %arg5[%c2_83, %c0_84, %c0_85], %136 {strides = array<i32>} : memref<8x8x128xf32, #tpu.memory_space<vmem>>, vector<1x1x128xf32>,
    %c1_i32_86 = arith.constant 1 : i32
    %137 = arith.addi %0, %c1_i32_86 : i32
    %138 = arith.index_cast %137 : i32 to index
    %c2_87 = arith.constant 2 : index
    %139 = memref.load %arg1[%138, %c2_87] : memref<8x8xi32, #tpu.memory_space<smem>>
    %140 = arith.index_cast %139 : i32 to index
    %c0_88 = arith.constant 0 : index
    %141 = vector.load %arg2[%140, %c0_88] : memref<50x128xf32, #tpu.memory_space<vmem>>, vector<1x128xf32>
    %c2_89 = arith.constant 2 : index
    %c1_90 = arith.constant 1 : index
    %c0_91 = arith.constant 0 : index
    %142 = vector.load %arg5[%c2_89, %c1_90, %c0_91] : memref<8x8x128xf32, #tpu.memory_space<vmem>>, vector<1x1x128xf32>
    %143 = vector.shape_cast %142 : vector<1x1x128xf32> to vector<1x128xf32>
    %144 = vector.shape_cast %141 : vector<1x128xf32> to vector<1x1x128xf32>
    tpu.vector_store %arg5[%c2_89, %c1_90, %c0_91], %144 {strides = array<i32>} : memref<8x8x128xf32, #tpu.memory_space<vmem>>, vector<1x1x128xf32>,
    %c2_i32_92 = arith.constant 2 : i32
    %145 = arith.addi %0, %c2_i32_92 : i32
    %146 = arith.index_cast %145 : i32 to index
    %c2_93 = arith.constant 2 : index
    %147 = memref.load %arg1[%146, %c2_93] : memref<8x8xi32, #tpu.memory_space<smem>>
    %148 = arith.index_cast %147 : i32 to index
    %c0_94 = arith.constant 0 : index
    %149 = vector.load %arg2[%148, %c0_94] : memref<50x128xf32, #tpu.memory_space<vmem>>, vector<1x128xf32>
    %c2_95 = arith.constant 2 : index
    %c2_96 = arith.constant 2 : index
    %c0_97 = arith.constant 0 : index
    %150 = vector.load %arg5[%c2_95, %c2_96, %c0_97] : memref<8x8x128xf32, #tpu.memory_space<vmem>>, vector<1x1x128xf32>
    %151 = vector.shape_cast %150 : vector<1x1x128xf32> to vector<1x128xf32>
    %152 = vector.shape_cast %149 : vector<1x128xf32> to vector<1x1x128xf32>
    tpu.vector_store %arg5[%c2_95, %c2_96, %c0_97], %152 {strides = array<i32>} : memref<8x8x128xf32, #tpu.memory_space<vmem>>, vector<1x1x128xf32>,
    %c3_i32_98 = arith.constant 3 : i32
    %153 = arith.addi %0, %c3_i32_98 : i32
    %154 = arith.index_cast %153 : i32 to index
    %c2_99 = arith.constant 2 : index
    %155 = memref.load %arg1[%154, %c2_99] : memref<8x8xi32, #tpu.memory_space<smem>>
    %156 = arith.index_cast %155 : i32 to index
    %c0_100 = arith.constant 0 : index
    %157 = vector.load %arg2[%156, %c0_100] : memref<50x128xf32, #tpu.memory_space<vmem>>, vector<1x128xf32>
    %c2_101 = arith.constant 2 : index
    %c3_102 = arith.constant 3 : index
    %c0_103 = arith.constant 0 : index
    %158 = vector.load %arg5[%c2_101, %c3_102, %c0_103] : memref<8x8x128xf32, #tpu.memory_space<vmem>>, vector<1x1x128xf32>
    %159 = vector.shape_cast %158 : vector<1x1x128xf32> to vector<1x128xf32>
    %160 = vector.shape_cast %157 : vector<1x128xf32> to vector<1x1x128xf32>
    tpu.vector_store %arg5[%c2_101, %c3_102, %c0_103], %160 {strides = array<i32>} : memref<8x8x128xf32, #tpu.memory_space<vmem>>, vector<1x1x128xf32>,
    %c4_i32_104 = arith.constant 4 : i32
    %161 = arith.addi %0, %c4_i32_104 : i32
    %162 = arith.index_cast %161 : i32 to index
    %c2_105 = arith.constant 2 : index
    %163 = memref.load %arg1[%162, %c2_105] : memref<8x8xi32, #tpu.memory_space<smem>>
    %164 = arith.index_cast %163 : i32 to index
    %c0_106 = arith.constant 0 : index
    %165 = vector.load %arg2[%164, %c0_106] : memref<50x128xf32, #tpu.memory_space<vmem>>, vector<1x128xf32>
    %c2_107 = arith.constant 2 : index
    %c4_108 = arith.constant 4 : index
    %c0_109 = arith.constant 0 : index
    %166 = vector.load %arg5[%c2_107, %c4_108, %c0_109] : memref<8x8x128xf32, #tpu.memory_space<vmem>>, vector<1x1x128xf32>
    %167 = vector.shape_cast %166 : vector<1x1x128xf32> to vector<1x128xf32>
    %168 = vector.shape_cast %165 : vector<1x128xf32> to vector<1x1x128xf32>
    tpu.vector_store %arg5[%c2_107, %c4_108, %c0_109], %168 {strides = array<i32>} : memref<8x8x128xf32, #tpu.memory_space<vmem>>, vector<1x1x128xf32>,
    %c5_i32_110 = arith.constant 5 : i32
    %169 = arith.addi %0, %c5_i32_110 : i32
    %170 = arith.index_cast %169 : i32 to index
    %c2_111 = arith.constant 2 : index
    %171 = memref.load %arg1[%170, %c2_111] : memref<8x8xi32, #tpu.memory_space<smem>>
    %172 = arith.index_cast %171 : i32 to index
    %c0_112 = arith.constant 0 : index
    %173 = vector.load %arg2[%172, %c0_112] : memref<50x128xf32, #tpu.memory_space<vmem>>, vector<1x128xf32>
    %c2_113 = arith.constant 2 : index
    %c5_114 = arith.constant 5 : index
    %c0_115 = arith.constant 0 : index
    %174 = vector.load %arg5[%c2_113, %c5_114, %c0_115] : memref<8x8x128xf32, #tpu.memory_space<vmem>>, vector<1x1x128xf32>
    %175 = vector.shape_cast %174 : vector<1x1x128xf32> to vector<1x128xf32>
    %176 = vector.shape_cast %173 : vector<1x128xf32> to vector<1x1x128xf32>
    tpu.vector_store %arg5[%c2_113, %c5_114, %c0_115], %176 {strides = array<i32>} : memref<8x8x128xf32, #tpu.memory_space<vmem>>, vector<1x1x128xf32>,
    %c6_i32_116 = arith.constant 6 : i32
    %177 = arith.addi %0, %c6_i32_116 : i32
    %178 = arith.index_cast %177 : i32 to index
    %c2_117 = arith.constant 2 : index
    %179 = memref.load %arg1[%178, %c2_117] : memref<8x8xi32, #tpu.memory_space<smem>>
    %180 = arith.index_cast %179 : i32 to index
    %c0_118 = arith.constant 0 : index
    %181 = vector.load %arg2[%180, %c0_118] : memref<50x128xf32, #tpu.memory_space<vmem>>, vector<1x128xf32>
    %c2_119 = arith.constant 2 : index
    %c6_120 = arith.constant 6 : index
    %c0_121 = arith.constant 0 : index
    %182 = vector.load %arg5[%c2_119, %c6_120, %c0_121] : memref<8x8x128xf32, #tpu.memory_space<vmem>>, vector<1x1x128xf32>
    %183 = vector.shape_cast %182 : vector<1x1x128xf32> to vector<1x128xf32>
    %184 = vector.shape_cast %181 : vector<1x128xf32> to vector<1x1x128xf32>
    tpu.vector_store %arg5[%c2_119, %c6_120, %c0_121], %184 {strides = array<i32>} : memref<8x8x128xf32, #tpu.memory_space<vmem>>, vector<1x1x128xf32>,
    %c7_i32_122 = arith.constant 7 : i32
    %185 = arith.addi %0, %c7_i32_122 : i32
    %186 = arith.index_cast %185 : i32 to index
    %c2_123 = arith.constant 2 : index
    %187 = memref.load %arg1[%186, %c2_123] : memref<8x8xi32, #tpu.memory_space<smem>>
    %188 = arith.index_cast %187 : i32 to index
    %c0_124 = arith.constant 0 : index
    %189 = vector.load %arg2[%188, %c0_124] : memref<50x128xf32, #tpu.memory_space<vmem>>, vector<1x128xf32>
    %c2_125 = arith.constant 2 : index
    %c7_126 = arith.constant 7 : index
    %c0_127 = arith.constant 0 : index
    %190 = vector.load %arg5[%c2_125, %c7_126, %c0_127] : memref<8x8x128xf32, #tpu.memory_space<vmem>>, vector<1x1x128xf32>
    %191 = vector.shape_cast %190 : vector<1x1x128xf32> to vector<1x128xf32>
    %192 = vector.shape_cast %189 : vector<1x128xf32> to vector<1x1x128xf32>
    tpu.vector_store %arg5[%c2_125, %c7_126, %c0_127], %192 {strides = array<i32>} : memref<8x8x128xf32, #tpu.memory_space<vmem>>, vector<1x1x128xf32>,
    %c0_i32_128 = arith.constant 0 : i32
    %193 = arith.addi %0, %c0_i32_128 : i32
    %194 = arith.index_cast %193 : i32 to index
    %c3_129 = arith.constant 3 : index
    %195 = memref.load %arg1[%194, %c3_129] : memref<8x8xi32, #tpu.memory_space<smem>>
    %196 = arith.index_cast %195 : i32 to index
    %c0_130 = arith.constant 0 : index
    %197 = vector.load %arg2[%196, %c0_130] : memref<50x128xf32, #tpu.memory_space<vmem>>, vector<1x128xf32>
    %c3_131 = arith.constant 3 : index
    %c0_132 = arith.constant 0 : index
    %c0_133 = arith.constant 0 : index
    %198 = vector.load %arg5[%c3_131, %c0_132, %c0_133] : memref<8x8x128xf32, #tpu.memory_space<vmem>>, vector<1x1x128xf32>
    %199 = vector.shape_cast %198 : vector<1x1x128xf32> to vector<1x128xf32>
    %200 = vector.shape_cast %197 : vector<1x128xf32> to vector<1x1x128xf32>
    tpu.vector_store %arg5[%c3_131, %c0_132, %c0_133], %200 {strides = array<i32>} : memref<8x8x128xf32, #tpu.memory_space<vmem>>, vector<1x1x128xf32>,
    %c1_i32_134 = arith.constant 1 : i32
    %201 = arith.addi %0, %c1_i32_134 : i32
    %202 = arith.index_cast %201 : i32 to index
    %c3_135 = arith.constant 3 : index
    %203 = memref.load %arg1[%202, %c3_135] : memref<8x8xi32, #tpu.memory_space<smem>>
    %204 = arith.index_cast %203 : i32 to index
    %c0_136 = arith.constant 0 : index
    %205 = vector.load %arg2[%204, %c0_136] : memref<50x128xf32, #tpu.memory_space<vmem>>, vector<1x128xf32>
    %c3_137 = arith.constant 3 : index
    %c1_138 = arith.constant 1 : index
    %c0_139 = arith.constant 0 : index
    %206 = vector.load %arg5[%c3_137, %c1_138, %c0_139] : memref<8x8x128xf32, #tpu.memory_space<vmem>>, vector<1x1x128xf32>
    %207 = vector.shape_cast %206 : vector<1x1x128xf32> to vector<1x128xf32>
    %208 = vector.shape_cast %205 : vector<1x128xf32> to vector<1x1x128xf32>
    tpu.vector_store %arg5[%c3_137, %c1_138, %c0_139], %208 {strides = array<i32>} : memref<8x8x128xf32, #tpu.memory_space<vmem>>, vector<1x1x128xf32>,
    %c2_i32_140 = arith.constant 2 : i32
    %209 = arith.addi %0, %c2_i32_140 : i32
    %210 = arith.index_cast %209 : i32 to index
    %c3_141 = arith.constant 3 : index
    %211 = memref.load %arg1[%210, %c3_141] : memref<8x8xi32, #tpu.memory_space<smem>>
    %212 = arith.index_cast %211 : i32 to index
    %c0_142 = arith.constant 0 : index
    %213 = vector.load %arg2[%212, %c0_142] : memref<50x128xf32, #tpu.memory_space<vmem>>, vector<1x128xf32>
    %c3_143 = arith.constant 3 : index
    %c2_144 = arith.constant 2 : index
    %c0_145 = arith.constant 0 : index
    %214 = vector.load %arg5[%c3_143, %c2_144, %c0_145] : memref<8x8x128xf32, #tpu.memory_space<vmem>>, vector<1x1x128xf32>
    %215 = vector.shape_cast %214 : vector<1x1x128xf32> to vector<1x128xf32>
    %216 = vector.shape_cast %213 : vector<1x128xf32> to vector<1x1x128xf32>
    tpu.vector_store %arg5[%c3_143, %c2_144, %c0_145], %216 {strides = array<i32>} : memref<8x8x128xf32, #tpu.memory_space<vmem>>, vector<1x1x128xf32>,
    %c3_i32_146 = arith.constant 3 : i32
    %217 = arith.addi %0, %c3_i32_146 : i32
    %218 = arith.index_cast %217 : i32 to index
    %c3_147 = arith.constant 3 : index
    %219 = memref.load %arg1[%218, %c3_147] : memref<8x8xi32, #tpu.memory_space<smem>>
    %220 = arith.index_cast %219 : i32 to index
    %c0_148 = arith.constant 0 : index
    %221 = vector.load %arg2[%220, %c0_148] : memref<50x128xf32, #tpu.memory_space<vmem>>, vector<1x128xf32>
    %c3_149 = arith.constant 3 : index
    %c3_150 = arith.constant 3 : index
    %c0_151 = arith.constant 0 : index
    %222 = vector.load %arg5[%c3_149, %c3_150, %c0_151] : memref<8x8x128xf32, #tpu.memory_space<vmem>>, vector<1x1x128xf32>
    %223 = vector.shape_cast %222 : vector<1x1x128xf32> to vector<1x128xf32>
    %224 = vector.shape_cast %221 : vector<1x128xf32> to vector<1x1x128xf32>
    tpu.vector_store %arg5[%c3_149, %c3_150, %c0_151], %224 {strides = array<i32>} : memref<8x8x128xf32, #tpu.memory_space<vmem>>, vector<1x1x128xf32>,
    %c4_i32_152 = arith.constant 4 : i32
    %225 = arith.addi %0, %c4_i32_152 : i32
    %226 = arith.index_cast %225 : i32 to index
    %c3_153 = arith.constant 3 : index
    %227 = memref.load %arg1[%226, %c3_153] : memref<8x8xi32, #tpu.memory_space<smem>>
    %228 = arith.index_cast %227 : i32 to index
    %c0_154 = arith.constant 0 : index
    %229 = vector.load %arg2[%228, %c0_154] : memref<50x128xf32, #tpu.memory_space<vmem>>, vector<1x128xf32>
    %c3_155 = arith.constant 3 : index
    %c4_156 = arith.constant 4 : index
    %c0_157 = arith.constant 0 : index
    %230 = vector.load %arg5[%c3_155, %c4_156, %c0_157] : memref<8x8x128xf32, #tpu.memory_space<vmem>>, vector<1x1x128xf32>
    %231 = vector.shape_cast %230 : vector<1x1x128xf32> to vector<1x128xf32>
    %232 = vector.shape_cast %229 : vector<1x128xf32> to vector<1x1x128xf32>
    tpu.vector_store %arg5[%c3_155, %c4_156, %c0_157], %232 {strides = array<i32>} : memref<8x8x128xf32, #tpu.memory_space<vmem>>, vector<1x1x128xf32>,
    %c5_i32_158 = arith.constant 5 : i32
    %233 = arith.addi %0, %c5_i32_158 : i32
    %234 = arith.index_cast %233 : i32 to index
    %c3_159 = arith.constant 3 : index
    %235 = memref.load %arg1[%234, %c3_159] : memref<8x8xi32, #tpu.memory_space<smem>>
    %236 = arith.index_cast %235 : i32 to index
    %c0_160 = arith.constant 0 : index
    %237 = vector.load %arg2[%236, %c0_160] : memref<50x128xf32, #tpu.memory_space<vmem>>, vector<1x128xf32>
    %c3_161 = arith.constant 3 : index
    %c5_162 = arith.constant 5 : index
    %c0_163 = arith.constant 0 : index
    %238 = vector.load %arg5[%c3_161, %c5_162, %c0_163] : memref<8x8x128xf32, #tpu.memory_space<vmem>>, vector<1x1x128xf32>
    %239 = vector.shape_cast %238 : vector<1x1x128xf32> to vector<1x128xf32>
    %240 = vector.shape_cast %237 : vector<1x128xf32> to vector<1x1x128xf32>
    tpu.vector_store %arg5[%c3_161, %c5_162, %c0_163], %240 {strides = array<i32>} : memref<8x8x128xf32, #tpu.memory_space<vmem>>, vector<1x1x128xf32>,
    %c6_i32_164 = arith.constant 6 : i32
    %241 = arith.addi %0, %c6_i32_164 : i32
    %242 = arith.index_cast %241 : i32 to index
    %c3_165 = arith.constant 3 : index
    %243 = memref.load %arg1[%242, %c3_165] : memref<8x8xi32, #tpu.memory_space<smem>>
    %244 = arith.index_cast %243 : i32 to index
    %c0_166 = arith.constant 0 : index
    %245 = vector.load %arg2[%244, %c0_166] : memref<50x128xf32, #tpu.memory_space<vmem>>, vector<1x128xf32>
    %c3_167 = arith.constant 3 : index
    %c6_168 = arith.constant 6 : index
    %c0_169 = arith.constant 0 : index
    %246 = vector.load %arg5[%c3_167, %c6_168, %c0_169] : memref<8x8x128xf32, #tpu.memory_space<vmem>>, vector<1x1x128xf32>
    %247 = vector.shape_cast %246 : vector<1x1x128xf32> to vector<1x128xf32>
    %248 = vector.shape_cast %245 : vector<1x128xf32> to vector<1x1x128xf32>
    tpu.vector_store %arg5[%c3_167, %c6_168, %c0_169], %248 {strides = array<i32>} : memref<8x8x128xf32, #tpu.memory_space<vmem>>, vector<1x1x128xf32>,
    %c7_i32_170 = arith.constant 7 : i32
    %249 = arith.addi %0, %c7_i32_170 : i32
    %250 = arith.index_cast %249 : i32 to index
    %c3_171 = arith.constant 3 : index
    %251 = memref.load %arg1[%250, %c3_171] : memref<8x8xi32, #tpu.memory_space<smem>>
    %252 = arith.index_cast %251 : i32 to index
    %c0_172 = arith.constant 0 : index
    %253 = vector.load %arg2[%252, %c0_172] : memref<50x128xf32, #tpu.memory_space<vmem>>, vector<1x128xf32>
    %c3_173 = arith.constant 3 : index
    %c7_174 = arith.constant 7 : index
    %c0_175 = arith.constant 0 : index
    %254 = vector.load %arg5[%c3_173, %c7_174, %c0_175] : memref<8x8x128xf32, #tpu.memory_space<vmem>>, vector<1x1x128xf32>
    %255 = vector.shape_cast %254 : vector<1x1x128xf32> to vector<1x128xf32>
    %256 = vector.shape_cast %253 : vector<1x128xf32> to vector<1x1x128xf32>
    tpu.vector_store %arg5[%c3_173, %c7_174, %c0_175], %256 {strides = array<i32>} : memref<8x8x128xf32, #tpu.memory_space<vmem>>, vector<1x1x128xf32>,
    %c0_i32_176 = arith.constant 0 : i32
    %257 = arith.addi %0, %c0_i32_176 : i32
    %258 = arith.index_cast %257 : i32 to index
    %c4_177 = arith.constant 4 : index
    %259 = memref.load %arg1[%258, %c4_177] : memref<8x8xi32, #tpu.memory_space<smem>>
    %260 = arith.index_cast %259 : i32 to index
    %c0_178 = arith.constant 0 : index
    %261 = vector.load %arg2[%260, %c0_178] : memref<50x128xf32, #tpu.memory_space<vmem>>, vector<1x128xf32>
    %c4_179 = arith.constant 4 : index
    %c0_180 = arith.constant 0 : index
    %c0_181 = arith.constant 0 : index
    %262 = vector.load %arg5[%c4_179, %c0_180, %c0_181] : memref<8x8x128xf32, #tpu.memory_space<vmem>>, vector<1x1x128xf32>
    %263 = vector.shape_cast %262 : vector<1x1x128xf32> to vector<1x128xf32>
    %264 = vector.shape_cast %261 : vector<1x128xf32> to vector<1x1x128xf32>
    tpu.vector_store %arg5[%c4_179, %c0_180, %c0_181], %264 {strides = array<i32>} : memref<8x8x128xf32, #tpu.memory_space<vmem>>, vector<1x1x128xf32>,
    %c1_i32_182 = arith.constant 1 : i32
    %265 = arith.addi %0, %c1_i32_182 : i32
    %266 = arith.index_cast %265 : i32 to index
    %c4_183 = arith.constant 4 : index
    %267 = memref.load %arg1[%266, %c4_183] : memref<8x8xi32, #tpu.memory_space<smem>>
    %268 = arith.index_cast %267 : i32 to index
    %c0_184 = arith.constant 0 : index
    %269 = vector.load %arg2[%268, %c0_184] : memref<50x128xf32, #tpu.memory_space<vmem>>, vector<1x128xf32>
    %c4_185 = arith.constant 4 : index
    %c1_186 = arith.constant 1 : index
    %c0_187 = arith.constant 0 : index
    %270 = vector.load %arg5[%c4_185, %c1_186, %c0_187] : memref<8x8x128xf32, #tpu.memory_space<vmem>>, vector<1x1x128xf32>
    %271 = vector.shape_cast %270 : vector<1x1x128xf32> to vector<1x128xf32>
    %272 = vector.shape_cast %269 : vector<1x128xf32> to vector<1x1x128xf32>
    tpu.vector_store %arg5[%c4_185, %c1_186, %c0_187], %272 {strides = array<i32>} : memref<8x8x128xf32, #tpu.memory_space<vmem>>, vector<1x1x128xf32>,
    %c2_i32_188 = arith.constant 2 : i32
    %273 = arith.addi %0, %c2_i32_188 : i32
    %274 = arith.index_cast %273 : i32 to index
    %c4_189 = arith.constant 4 : index
    %275 = memref.load %arg1[%274, %c4_189] : memref<8x8xi32, #tpu.memory_space<smem>>
    %276 = arith.index_cast %275 : i32 to index
    %c0_190 = arith.constant 0 : index
    %277 = vector.load %arg2[%276, %c0_190] : memref<50x128xf32, #tpu.memory_space<vmem>>, vector<1x128xf32>
    %c4_191 = arith.constant 4 : index
    %c2_192 = arith.constant 2 : index
    %c0_193 = arith.constant 0 : index
    %278 = vector.load %arg5[%c4_191, %c2_192, %c0_193] : memref<8x8x128xf32, #tpu.memory_space<vmem>>, vector<1x1x128xf32>
    %279 = vector.shape_cast %278 : vector<1x1x128xf32> to vector<1x128xf32>
    %280 = vector.shape_cast %277 : vector<1x128xf32> to vector<1x1x128xf32>
    tpu.vector_store %arg5[%c4_191, %c2_192, %c0_193], %280 {strides = array<i32>} : memref<8x8x128xf32, #tpu.memory_space<vmem>>, vector<1x1x128xf32>,
    %c3_i32_194 = arith.constant 3 : i32
    %281 = arith.addi %0, %c3_i32_194 : i32
    %282 = arith.index_cast %281 : i32 to index
    %c4_195 = arith.constant 4 : index
    %283 = memref.load %arg1[%282, %c4_195] : memref<8x8xi32, #tpu.memory_space<smem>>
    %284 = arith.index_cast %283 : i32 to index
    %c0_196 = arith.constant 0 : index
    %285 = vector.load %arg2[%284, %c0_196] : memref<50x128xf32, #tpu.memory_space<vmem>>, vector<1x128xf32>
    %c4_197 = arith.constant 4 : index
    %c3_198 = arith.constant 3 : index
    %c0_199 = arith.constant 0 : index
    %286 = vector.load %arg5[%c4_197, %c3_198, %c0_199] : memref<8x8x128xf32, #tpu.memory_space<vmem>>, vector<1x1x128xf32>
    %287 = vector.shape_cast %286 : vector<1x1x128xf32> to vector<1x128xf32>
    %288 = vector.shape_cast %285 : vector<1x128xf32> to vector<1x1x128xf32>
    tpu.vector_store %arg5[%c4_197, %c3_198, %c0_199], %288 {strides = array<i32>} : memref<8x8x128xf32, #tpu.memory_space<vmem>>, vector<1x1x128xf32>,
    %c4_i32_200 = arith.constant 4 : i32
    %289 = arith.addi %0, %c4_i32_200 : i32
    %290 = arith.index_cast %289 : i32 to index
    %c4_201 = arith.constant 4 : index
    %291 = memref.load %arg1[%290, %c4_201] : memref<8x8xi32, #tpu.memory_space<smem>>
    %292 = arith.index_cast %291 : i32 to index
    %c0_202 = arith.constant 0 : index
    %293 = vector.load %arg2[%292, %c0_202] : memref<50x128xf32, #tpu.memory_space<vmem>>, vector<1x128xf32>
    %c4_203 = arith.constant 4 : index
    %c4_204 = arith.constant 4 : index
    %c0_205 = arith.constant 0 : index
    %294 = vector.load %arg5[%c4_203, %c4_204, %c0_205] : memref<8x8x128xf32, #tpu.memory_space<vmem>>, vector<1x1x128xf32>
    %295 = vector.shape_cast %294 : vector<1x1x128xf32> to vector<1x128xf32>
    %296 = vector.shape_cast %293 : vector<1x128xf32> to vector<1x1x128xf32>
    tpu.vector_store %arg5[%c4_203, %c4_204, %c0_205], %296 {strides = array<i32>} : memref<8x8x128xf32, #tpu.memory_space<vmem>>, vector<1x1x128xf32>,
    %c5_i32_206 = arith.constant 5 : i32
    %297 = arith.addi %0, %c5_i32_206 : i32
    %298 = arith.index_cast %297 : i32 to index
    %c4_207 = arith.constant 4 : index
    %299 = memref.load %arg1[%298, %c4_207] : memref<8x8xi32, #tpu.memory_space<smem>>
    %300 = arith.index_cast %299 : i32 to index
    %c0_208 = arith.constant 0 : index
    %301 = vector.load %arg2[%300, %c0_208] : memref<50x128xf32, #tpu.memory_space<vmem>>, vector<1x128xf32>
    %c4_209 = arith.constant 4 : index
    %c5_210 = arith.constant 5 : index
    %c0_211 = arith.constant 0 : index
    %302 = vector.load %arg5[%c4_209, %c5_210, %c0_211] : memref<8x8x128xf32, #tpu.memory_space<vmem>>, vector<1x1x128xf32>
    %303 = vector.shape_cast %302 : vector<1x1x128xf32> to vector<1x128xf32>
    %304 = vector.shape_cast %301 : vector<1x128xf32> to vector<1x1x128xf32>
    tpu.vector_store %arg5[%c4_209, %c5_210, %c0_211], %304 {strides = array<i32>} : memref<8x8x128xf32, #tpu.memory_space<vmem>>, vector<1x1x128xf32>,
    %c6_i32_212 = arith.constant 6 : i32
    %305 = arith.addi %0, %c6_i32_212 : i32
    %306 = arith.index_cast %305 : i32 to index
    %c4_213 = arith.constant 4 : index
    %307 = memref.load %arg1[%306, %c4_213] : memref<8x8xi32, #tpu.memory_space<smem>>
    %308 = arith.index_cast %307 : i32 to index
    %c0_214 = arith.constant 0 : index
    %309 = vector.load %arg2[%308, %c0_214] : memref<50x128xf32, #tpu.memory_space<vmem>>, vector<1x128xf32>
    %c4_215 = arith.constant 4 : index
    %c6_216 = arith.constant 6 : index
    %c0_217 = arith.constant 0 : index
    %310 = vector.load %arg5[%c4_215, %c6_216, %c0_217] : memref<8x8x128xf32, #tpu.memory_space<vmem>>, vector<1x1x128xf32>
    %311 = vector.shape_cast %310 : vector<1x1x128xf32> to vector<1x128xf32>
    %312 = vector.shape_cast %309 : vector<1x128xf32> to vector<1x1x128xf32>
    tpu.vector_store %arg5[%c4_215, %c6_216, %c0_217], %312 {strides = array<i32>} : memref<8x8x128xf32, #tpu.memory_space<vmem>>, vector<1x1x128xf32>,
    %c7_i32_218 = arith.constant 7 : i32
    %313 = arith.addi %0, %c7_i32_218 : i32
    %314 = arith.index_cast %313 : i32 to index
    %c4_219 = arith.constant 4 : index
    %315 = memref.load %arg1[%314, %c4_219] : memref<8x8xi32, #tpu.memory_space<smem>>
    %316 = arith.index_cast %315 : i32 to index
    %c0_220 = arith.constant 0 : index
    %317 = vector.load %arg2[%316, %c0_220] : memref<50x128xf32, #tpu.memory_space<vmem>>, vector<1x128xf32>
    %c4_221 = arith.constant 4 : index
    %c7_222 = arith.constant 7 : index
    %c0_223 = arith.constant 0 : index
    %318 = vector.load %arg5[%c4_221, %c7_222, %c0_223] : memref<8x8x128xf32, #tpu.memory_space<vmem>>, vector<1x1x128xf32>
    %319 = vector.shape_cast %318 : vector<1x1x128xf32> to vector<1x128xf32>
    %320 = vector.shape_cast %317 : vector<1x128xf32> to vector<1x1x128xf32>
    tpu.vector_store %arg5[%c4_221, %c7_222, %c0_223], %320 {strides = array<i32>} : memref<8x8x128xf32, #tpu.memory_space<vmem>>, vector<1x1x128xf32>,
    %c0_i32_224 = arith.constant 0 : i32
    %321 = arith.addi %0, %c0_i32_224 : i32
    %322 = arith.index_cast %321 : i32 to index
    %c5_225 = arith.constant 5 : index
    %323 = memref.load %arg1[%322, %c5_225] : memref<8x8xi32, #tpu.memory_space<smem>>
    %324 = arith.index_cast %323 : i32 to index
    %c0_226 = arith.constant 0 : index
    %325 = vector.load %arg2[%324, %c0_226] : memref<50x128xf32, #tpu.memory_space<vmem>>, vector<1x128xf32>
    %c5_227 = arith.constant 5 : index
    %c0_228 = arith.constant 0 : index
    %c0_229 = arith.constant 0 : index
    %326 = vector.load %arg5[%c5_227, %c0_228, %c0_229] : memref<8x8x128xf32, #tpu.memory_space<vmem>>, vector<1x1x128xf32>
    %327 = vector.shape_cast %326 : vector<1x1x128xf32> to vector<1x128xf32>
    %328 = vector.shape_cast %325 : vector<1x128xf32> to vector<1x1x128xf32>
    tpu.vector_store %arg5[%c5_227, %c0_228, %c0_229], %328 {strides = array<i32>} : memref<8x8x128xf32, #tpu.memory_space<vmem>>, vector<1x1x128xf32>,
    %c1_i32_230 = arith.constant 1 : i32
    %329 = arith.addi %0, %c1_i32_230 : i32
    %330 = arith.index_cast %329 : i32 to index
    %c5_231 = arith.constant 5 : index
    %331 = memref.load %arg1[%330, %c5_231] : memref<8x8xi32, #tpu.memory_space<smem>>
    %332 = arith.index_cast %331 : i32 to index
    %c0_232 = arith.constant 0 : index
    %333 = vector.load %arg2[%332, %c0_232] : memref<50x128xf32, #tpu.memory_space<vmem>>, vector<1x128xf32>
    %c5_233 = arith.constant 5 : index
    %c1_234 = arith.constant 1 : index
    %c0_235 = arith.constant 0 : index
    %334 = vector.load %arg5[%c5_233, %c1_234, %c0_235] : memref<8x8x128xf32, #tpu.memory_space<vmem>>, vector<1x1x128xf32>
    %335 = vector.shape_cast %334 : vector<1x1x128xf32> to vector<1x128xf32>
    %336 = vector.shape_cast %333 : vector<1x128xf32> to vector<1x1x128xf32>
    tpu.vector_store %arg5[%c5_233, %c1_234, %c0_235], %336 {strides = array<i32>} : memref<8x8x128xf32, #tpu.memory_space<vmem>>, vector<1x1x128xf32>,
    %c2_i32_236 = arith.constant 2 : i32
    %337 = arith.addi %0, %c2_i32_236 : i32
    %338 = arith.index_cast %337 : i32 to index
    %c5_237 = arith.constant 5 : index
    %339 = memref.load %arg1[%338, %c5_237] : memref<8x8xi32, #tpu.memory_space<smem>>
    %340 = arith.index_cast %339 : i32 to index
    %c0_238 = arith.constant 0 : index
    %341 = vector.load %arg2[%340, %c0_238] : memref<50x128xf32, #tpu.memory_space<vmem>>, vector<1x128xf32>
    %c5_239 = arith.constant 5 : index
    %c2_240 = arith.constant 2 : index
    %c0_241 = arith.constant 0 : index
    %342 = vector.load %arg5[%c5_239, %c2_240, %c0_241] : memref<8x8x128xf32, #tpu.memory_space<vmem>>, vector<1x1x128xf32>
    %343 = vector.shape_cast %342 : vector<1x1x128xf32> to vector<1x128xf32>
    %344 = vector.shape_cast %341 : vector<1x128xf32> to vector<1x1x128xf32>
    tpu.vector_store %arg5[%c5_239, %c2_240, %c0_241], %344 {strides = array<i32>} : memref<8x8x128xf32, #tpu.memory_space<vmem>>, vector<1x1x128xf32>,
    %c3_i32_242 = arith.constant 3 : i32
    %345 = arith.addi %0, %c3_i32_242 : i32
    %346 = arith.index_cast %345 : i32 to index
    %c5_243 = arith.constant 5 : index
    %347 = memref.load %arg1[%346, %c5_243] : memref<8x8xi32, #tpu.memory_space<smem>>
    %348 = arith.index_cast %347 : i32 to index
    %c0_244 = arith.constant 0 : index
    %349 = vector.load %arg2[%348, %c0_244] : memref<50x128xf32, #tpu.memory_space<vmem>>, vector<1x128xf32>
    %c5_245 = arith.constant 5 : index
    %c3_246 = arith.constant 3 : index
    %c0_247 = arith.constant 0 : index
    %350 = vector.load %arg5[%c5_245, %c3_246, %c0_247] : memref<8x8x128xf32, #tpu.memory_space<vmem>>, vector<1x1x128xf32>
    %351 = vector.shape_cast %350 : vector<1x1x128xf32> to vector<1x128xf32>
    %352 = vector.shape_cast %349 : vector<1x128xf32> to vector<1x1x128xf32>
    tpu.vector_store %arg5[%c5_245, %c3_246, %c0_247], %352 {strides = array<i32>} : memref<8x8x128xf32, #tpu.memory_space<vmem>>, vector<1x1x128xf32>,
    %c4_i32_248 = arith.constant 4 : i32
    %353 = arith.addi %0, %c4_i32_248 : i32
    %354 = arith.index_cast %353 : i32 to index
    %c5_249 = arith.constant 5 : index
    %355 = memref.load %arg1[%354, %c5_249] : memref<8x8xi32, #tpu.memory_space<smem>>
    %356 = arith.index_cast %355 : i32 to index
    %c0_250 = arith.constant 0 : index
    %357 = vector.load %arg2[%356, %c0_250] : memref<50x128xf32, #tpu.memory_space<vmem>>, vector<1x128xf32>
    %c5_251 = arith.constant 5 : index
    %c4_252 = arith.constant 4 : index
    %c0_253 = arith.constant 0 : index
    %358 = vector.load %arg5[%c5_251, %c4_252, %c0_253] : memref<8x8x128xf32, #tpu.memory_space<vmem>>, vector<1x1x128xf32>
    %359 = vector.shape_cast %358 : vector<1x1x128xf32> to vector<1x128xf32>
    %360 = vector.shape_cast %357 : vector<1x128xf32> to vector<1x1x128xf32>
    tpu.vector_store %arg5[%c5_251, %c4_252, %c0_253], %360 {strides = array<i32>} : memref<8x8x128xf32, #tpu.memory_space<vmem>>, vector<1x1x128xf32>,
    %c5_i32_254 = arith.constant 5 : i32
    %361 = arith.addi %0, %c5_i32_254 : i32
    %362 = arith.index_cast %361 : i32 to index
    %c5_255 = arith.constant 5 : index
    %363 = memref.load %arg1[%362, %c5_255] : memref<8x8xi32, #tpu.memory_space<smem>>
    %364 = arith.index_cast %363 : i32 to index
    %c0_256 = arith.constant 0 : index
    %365 = vector.load %arg2[%364, %c0_256] : memref<50x128xf32, #tpu.memory_space<vmem>>, vector<1x128xf32>
    %c5_257 = arith.constant 5 : index
    %c5_258 = arith.constant 5 : index
    %c0_259 = arith.constant 0 : index
    %366 = vector.load %arg5[%c5_257, %c5_258, %c0_259] : memref<8x8x128xf32, #tpu.memory_space<vmem>>, vector<1x1x128xf32>
    %367 = vector.shape_cast %366 : vector<1x1x128xf32> to vector<1x128xf32>
    %368 = vector.shape_cast %365 : vector<1x128xf32> to vector<1x1x128xf32>
    tpu.vector_store %arg5[%c5_257, %c5_258, %c0_259], %368 {strides = array<i32>} : memref<8x8x128xf32, #tpu.memory_space<vmem>>, vector<1x1x128xf32>,
    %c6_i32_260 = arith.constant 6 : i32
    %369 = arith.addi %0, %c6_i32_260 : i32
    %370 = arith.index_cast %369 : i32 to index
    %c5_261 = arith.constant 5 : index
    %371 = memref.load %arg1[%370, %c5_261] : memref<8x8xi32, #tpu.memory_space<smem>>
    %372 = arith.index_cast %371 : i32 to index
    %c0_262 = arith.constant 0 : index
    %373 = vector.load %arg2[%372, %c0_262] : memref<50x128xf32, #tpu.memory_space<vmem>>, vector<1x128xf32>
    %c5_263 = arith.constant 5 : index
    %c6_264 = arith.constant 6 : index
    %c0_265 = arith.constant 0 : index
    %374 = vector.load %arg5[%c5_263, %c6_264, %c0_265] : memref<8x8x128xf32, #tpu.memory_space<vmem>>, vector<1x1x128xf32>
    %375 = vector.shape_cast %374 : vector<1x1x128xf32> to vector<1x128xf32>
    %376 = vector.shape_cast %373 : vector<1x128xf32> to vector<1x1x128xf32>
    tpu.vector_store %arg5[%c5_263, %c6_264, %c0_265], %376 {strides = array<i32>} : memref<8x8x128xf32, #tpu.memory_space<vmem>>, vector<1x1x128xf32>,
    %c7_i32_266 = arith.constant 7 : i32
    %377 = arith.addi %0, %c7_i32_266 : i32
    %378 = arith.index_cast %377 : i32 to index
    %c5_267 = arith.constant 5 : index
    %379 = memref.load %arg1[%378, %c5_267] : memref<8x8xi32, #tpu.memory_space<smem>>
    %380 = arith.index_cast %379 : i32 to index
    %c0_268 = arith.constant 0 : index
    %381 = vector.load %arg2[%380, %c0_268] : memref<50x128xf32, #tpu.memory_space<vmem>>, vector<1x128xf32>
    %c5_269 = arith.constant 5 : index
    %c7_270 = arith.constant 7 : index
    %c0_271 = arith.constant 0 : index
    %382 = vector.load %arg5[%c5_269, %c7_270, %c0_271] : memref<8x8x128xf32, #tpu.memory_space<vmem>>, vector<1x1x128xf32>
    %383 = vector.shape_cast %382 : vector<1x1x128xf32> to vector<1x128xf32>
    %384 = vector.shape_cast %381 : vector<1x128xf32> to vector<1x1x128xf32>
    tpu.vector_store %arg5[%c5_269, %c7_270, %c0_271], %384 {strides = array<i32>} : memref<8x8x128xf32, #tpu.memory_space<vmem>>, vector<1x1x128xf32>,
    %c0_i32_272 = arith.constant 0 : i32
    %385 = arith.addi %0, %c0_i32_272 : i32
    %386 = arith.index_cast %385 : i32 to index
    %c6_273 = arith.constant 6 : index
    %387 = memref.load %arg1[%386, %c6_273] : memref<8x8xi32, #tpu.memory_space<smem>>
    %388 = arith.index_cast %387 : i32 to index
    %c0_274 = arith.constant 0 : index
    %389 = vector.load %arg2[%388, %c0_274] : memref<50x128xf32, #tpu.memory_space<vmem>>, vector<1x128xf32>
    %c6_275 = arith.constant 6 : index
    %c0_276 = arith.constant 0 : index
    %c0_277 = arith.constant 0 : index
    %390 = vector.load %arg5[%c6_275, %c0_276, %c0_277] : memref<8x8x128xf32, #tpu.memory_space<vmem>>, vector<1x1x128xf32>
    %391 = vector.shape_cast %390 : vector<1x1x128xf32> to vector<1x128xf32>
    %392 = vector.shape_cast %389 : vector<1x128xf32> to vector<1x1x128xf32>
    tpu.vector_store %arg5[%c6_275, %c0_276, %c0_277], %392 {strides = array<i32>} : memref<8x8x128xf32, #tpu.memory_space<vmem>>, vector<1x1x128xf32>,
    %c1_i32_278 = arith.constant 1 : i32
    %393 = arith.addi %0, %c1_i32_278 : i32
    %394 = arith.index_cast %393 : i32 to index
    %c6_279 = arith.constant 6 : index
    %395 = memref.load %arg1[%394, %c6_279] : memref<8x8xi32, #tpu.memory_space<smem>>
    %396 = arith.index_cast %395 : i32 to index
    %c0_280 = arith.constant 0 : index
    %397 = vector.load %arg2[%396, %c0_280] : memref<50x128xf32, #tpu.memory_space<vmem>>, vector<1x128xf32>
    %c6_281 = arith.constant 6 : index
    %c1_282 = arith.constant 1 : index
    %c0_283 = arith.constant 0 : index
    %398 = vector.load %arg5[%c6_281, %c1_282, %c0_283] : memref<8x8x128xf32, #tpu.memory_space<vmem>>, vector<1x1x128xf32>
    %399 = vector.shape_cast %398 : vector<1x1x128xf32> to vector<1x128xf32>
    %400 = vector.shape_cast %397 : vector<1x128xf32> to vector<1x1x128xf32>
    tpu.vector_store %arg5[%c6_281, %c1_282, %c0_283], %400 {strides = array<i32>} : memref<8x8x128xf32, #tpu.memory_space<vmem>>, vector<1x1x128xf32>,
    %c2_i32_284 = arith.constant 2 : i32
    %401 = arith.addi %0, %c2_i32_284 : i32
    %402 = arith.index_cast %401 : i32 to index
    %c6_285 = arith.constant 6 : index
    %403 = memref.load %arg1[%402, %c6_285] : memref<8x8xi32, #tpu.memory_space<smem>>
    %404 = arith.index_cast %403 : i32 to index
    %c0_286 = arith.constant 0 : index
    %405 = vector.load %arg2[%404, %c0_286] : memref<50x128xf32, #tpu.memory_space<vmem>>, vector<1x128xf32>
    %c6_287 = arith.constant 6 : index
    %c2_288 = arith.constant 2 : index
    %c0_289 = arith.constant 0 : index
    %406 = vector.load %arg5[%c6_287, %c2_288, %c0_289] : memref<8x8x128xf32, #tpu.memory_space<vmem>>, vector<1x1x128xf32>
    %407 = vector.shape_cast %406 : vector<1x1x128xf32> to vector<1x128xf32>
    %408 = vector.shape_cast %405 : vector<1x128xf32> to vector<1x1x128xf32>
    tpu.vector_store %arg5[%c6_287, %c2_288, %c0_289], %408 {strides = array<i32>} : memref<8x8x128xf32, #tpu.memory_space<vmem>>, vector<1x1x128xf32>,
    %c3_i32_290 = arith.constant 3 : i32
    %409 = arith.addi %0, %c3_i32_290 : i32
    %410 = arith.index_cast %409 : i32 to index
    %c6_291 = arith.constant 6 : index
    %411 = memref.load %arg1[%410, %c6_291] : memref<8x8xi32, #tpu.memory_space<smem>>
    %412 = arith.index_cast %411 : i32 to index
    %c0_292 = arith.constant 0 : index
    %413 = vector.load %arg2[%412, %c0_292] : memref<50x128xf32, #tpu.memory_space<vmem>>, vector<1x128xf32>
    %c6_293 = arith.constant 6 : index
    %c3_294 = arith.constant 3 : index
    %c0_295 = arith.constant 0 : index
    %414 = vector.load %arg5[%c6_293, %c3_294, %c0_295] : memref<8x8x128xf32, #tpu.memory_space<vmem>>, vector<1x1x128xf32>
    %415 = vector.shape_cast %414 : vector<1x1x128xf32> to vector<1x128xf32>
    %416 = vector.shape_cast %413 : vector<1x128xf32> to vector<1x1x128xf32>
    tpu.vector_store %arg5[%c6_293, %c3_294, %c0_295], %416 {strides = array<i32>} : memref<8x8x128xf32, #tpu.memory_space<vmem>>, vector<1x1x128xf32>,
    %c4_i32_296 = arith.constant 4 : i32
    %417 = arith.addi %0, %c4_i32_296 : i32
    %418 = arith.index_cast %417 : i32 to index
    %c6_297 = arith.constant 6 : index
    %419 = memref.load %arg1[%418, %c6_297] : memref<8x8xi32, #tpu.memory_space<smem>>
    %420 = arith.index_cast %419 : i32 to index
    %c0_298 = arith.constant 0 : index
    %421 = vector.load %arg2[%420, %c0_298] : memref<50x128xf32, #tpu.memory_space<vmem>>, vector<1x128xf32>
    %c6_299 = arith.constant 6 : index
    %c4_300 = arith.constant 4 : index
    %c0_301 = arith.constant 0 : index
    %422 = vector.load %arg5[%c6_299, %c4_300, %c0_301] : memref<8x8x128xf32, #tpu.memory_space<vmem>>, vector<1x1x128xf32>
    %423 = vector.shape_cast %422 : vector<1x1x128xf32> to vector<1x128xf32>
    %424 = vector.shape_cast %421 : vector<1x128xf32> to vector<1x1x128xf32>
    tpu.vector_store %arg5[%c6_299, %c4_300, %c0_301], %424 {strides = array<i32>} : memref<8x8x128xf32, #tpu.memory_space<vmem>>, vector<1x1x128xf32>,
    %c5_i32_302 = arith.constant 5 : i32
    %425 = arith.addi %0, %c5_i32_302 : i32
    %426 = arith.index_cast %425 : i32 to index
    %c6_303 = arith.constant 6 : index
    %427 = memref.load %arg1[%426, %c6_303] : memref<8x8xi32, #tpu.memory_space<smem>>
    %428 = arith.index_cast %427 : i32 to index
    %c0_304 = arith.constant 0 : index
    %429 = vector.load %arg2[%428, %c0_304] : memref<50x128xf32, #tpu.memory_space<vmem>>, vector<1x128xf32>
    %c6_305 = arith.constant 6 : index
    %c5_306 = arith.constant 5 : index
    %c0_307 = arith.constant 0 : index
    %430 = vector.load %arg5[%c6_305, %c5_306, %c0_307] : memref<8x8x128xf32, #tpu.memory_space<vmem>>, vector<1x1x128xf32>
    %431 = vector.shape_cast %430 : vector<1x1x128xf32> to vector<1x128xf32>
    %432 = vector.shape_cast %429 : vector<1x128xf32> to vector<1x1x128xf32>
    tpu.vector_store %arg5[%c6_305, %c5_306, %c0_307], %432 {strides = array<i32>} : memref<8x8x128xf32, #tpu.memory_space<vmem>>, vector<1x1x128xf32>,
    %c6_i32_308 = arith.constant 6 : i32
    %433 = arith.addi %0, %c6_i32_308 : i32
    %434 = arith.index_cast %433 : i32 to index
    %c6_309 = arith.constant 6 : index
    %435 = memref.load %arg1[%434, %c6_309] : memref<8x8xi32, #tpu.memory_space<smem>>
    %436 = arith.index_cast %435 : i32 to index
    %c0_310 = arith.constant 0 : index
    %437 = vector.load %arg2[%436, %c0_310] : memref<50x128xf32, #tpu.memory_space<vmem>>, vector<1x128xf32>
    %c6_311 = arith.constant 6 : index
    %c6_312 = arith.constant 6 : index
    %c0_313 = arith.constant 0 : index
    %438 = vector.load %arg5[%c6_311, %c6_312, %c0_313] : memref<8x8x128xf32, #tpu.memory_space<vmem>>, vector<1x1x128xf32>
    %439 = vector.shape_cast %438 : vector<1x1x128xf32> to vector<1x128xf32>
    %440 = vector.shape_cast %437 : vector<1x128xf32> to vector<1x1x128xf32>
    tpu.vector_store %arg5[%c6_311, %c6_312, %c0_313], %440 {strides = array<i32>} : memref<8x8x128xf32, #tpu.memory_space<vmem>>, vector<1x1x128xf32>,
    %c7_i32_314 = arith.constant 7 : i32
    %441 = arith.addi %0, %c7_i32_314 : i32
    %442 = arith.index_cast %441 : i32 to index
    %c6_315 = arith.constant 6 : index
    %443 = memref.load %arg1[%442, %c6_315] : memref<8x8xi32, #tpu.memory_space<smem>>
    %444 = arith.index_cast %443 : i32 to index
    %c0_316 = arith.constant 0 : index
    %445 = vector.load %arg2[%444, %c0_316] : memref<50x128xf32, #tpu.memory_space<vmem>>, vector<1x128xf32>
    %c6_317 = arith.constant 6 : index
    %c7_318 = arith.constant 7 : index
    %c0_319 = arith.constant 0 : index
    %446 = vector.load %arg5[%c6_317, %c7_318, %c0_319] : memref<8x8x128xf32, #tpu.memory_space<vmem>>, vector<1x1x128xf32>
    %447 = vector.shape_cast %446 : vector<1x1x128xf32> to vector<1x128xf32>
    %448 = vector.shape_cast %445 : vector<1x128xf32> to vector<1x1x128xf32>
    tpu.vector_store %arg5[%c6_317, %c7_318, %c0_319], %448 {strides = array<i32>} : memref<8x8x128xf32, #tpu.memory_space<vmem>>, vector<1x1x128xf32>,
    %c0_i32_320 = arith.constant 0 : i32
    %449 = arith.addi %0, %c0_i32_320 : i32
    %450 = arith.index_cast %449 : i32 to index
    %c7_321 = arith.constant 7 : index
    %451 = memref.load %arg1[%450, %c7_321] : memref<8x8xi32, #tpu.memory_space<smem>>
    %452 = arith.index_cast %451 : i32 to index
    %c0_322 = arith.constant 0 : index
    %453 = vector.load %arg2[%452, %c0_322] : memref<50x128xf32, #tpu.memory_space<vmem>>, vector<1x128xf32>
    %c7_323 = arith.constant 7 : index
    %c0_324 = arith.constant 0 : index
    %c0_325 = arith.constant 0 : index
    %454 = vector.load %arg5[%c7_323, %c0_324, %c0_325] : memref<8x8x128xf32, #tpu.memory_space<vmem>>, vector<1x1x128xf32>
    %455 = vector.shape_cast %454 : vector<1x1x128xf32> to vector<1x128xf32>
    %456 = vector.shape_cast %453 : vector<1x128xf32> to vector<1x1x128xf32>
    tpu.vector_store %arg5[%c7_323, %c0_324, %c0_325], %456 {strides = array<i32>} : memref<8x8x128xf32, #tpu.memory_space<vmem>>, vector<1x1x128xf32>,
    %c1_i32_326 = arith.constant 1 : i32
    %457 = arith.addi %0, %c1_i32_326 : i32
    %458 = arith.index_cast %457 : i32 to index
    %c7_327 = arith.constant 7 : index
    %459 = memref.load %arg1[%458, %c7_327] : memref<8x8xi32, #tpu.memory_space<smem>>
    %460 = arith.index_cast %459 : i32 to index
    %c0_328 = arith.constant 0 : index
    %461 = vector.load %arg2[%460, %c0_328] : memref<50x128xf32, #tpu.memory_space<vmem>>, vector<1x128xf32>
    %c7_329 = arith.constant 7 : index
    %c1_330 = arith.constant 1 : index
    %c0_331 = arith.constant 0 : index
    %462 = vector.load %arg5[%c7_329, %c1_330, %c0_331] : memref<8x8x128xf32, #tpu.memory_space<vmem>>, vector<1x1x128xf32>
    %463 = vector.shape_cast %462 : vector<1x1x128xf32> to vector<1x128xf32>
    %464 = vector.shape_cast %461 : vector<1x128xf32> to vector<1x1x128xf32>
    tpu.vector_store %arg5[%c7_329, %c1_330, %c0_331], %464 {strides = array<i32>} : memref<8x8x128xf32, #tpu.memory_space<vmem>>, vector<1x1x128xf32>,
    %c2_i32_332 = arith.constant 2 : i32
    %465 = arith.addi %0, %c2_i32_332 : i32
    %466 = arith.index_cast %465 : i32 to index
    %c7_333 = arith.constant 7 : index
    %467 = memref.load %arg1[%466, %c7_333] : memref<8x8xi32, #tpu.memory_space<smem>>
    %468 = arith.index_cast %467 : i32 to index
    %c0_334 = arith.constant 0 : index
    %469 = vector.load %arg2[%468, %c0_334] : memref<50x128xf32, #tpu.memory_space<vmem>>, vector<1x128xf32>
    %c7_335 = arith.constant 7 : index
    %c2_336 = arith.constant 2 : index
    %c0_337 = arith.constant 0 : index
    %470 = vector.load %arg5[%c7_335, %c2_336, %c0_337] : memref<8x8x128xf32, #tpu.memory_space<vmem>>, vector<1x1x128xf32>
    %471 = vector.shape_cast %470 : vector<1x1x128xf32> to vector<1x128xf32>
    %472 = vector.shape_cast %469 : vector<1x128xf32> to vector<1x1x128xf32>
    tpu.vector_store %arg5[%c7_335, %c2_336, %c0_337], %472 {strides = array<i32>} : memref<8x8x128xf32, #tpu.memory_space<vmem>>, vector<1x1x128xf32>,
    %c3_i32_338 = arith.constant 3 : i32
    %473 = arith.addi %0, %c3_i32_338 : i32
    %474 = arith.index_cast %473 : i32 to index
    %c7_339 = arith.constant 7 : index
    %475 = memref.load %arg1[%474, %c7_339] : memref<8x8xi32, #tpu.memory_space<smem>>
    %476 = arith.index_cast %475 : i32 to index
    %c0_340 = arith.constant 0 : index
    %477 = vector.load %arg2[%476, %c0_340] : memref<50x128xf32, #tpu.memory_space<vmem>>, vector<1x128xf32>
    %c7_341 = arith.constant 7 : index
    %c3_342 = arith.constant 3 : index
    %c0_343 = arith.constant 0 : index
    %478 = vector.load %arg5[%c7_341, %c3_342, %c0_343] : memref<8x8x128xf32, #tpu.memory_space<vmem>>, vector<1x1x128xf32>
    %479 = vector.shape_cast %478 : vector<1x1x128xf32> to vector<1x128xf32>
    %480 = vector.shape_cast %477 : vector<1x128xf32> to vector<1x1x128xf32>
    tpu.vector_store %arg5[%c7_341, %c3_342, %c0_343], %480 {strides = array<i32>} : memref<8x8x128xf32, #tpu.memory_space<vmem>>, vector<1x1x128xf32>,
    %c4_i32_344 = arith.constant 4 : i32
    %481 = arith.addi %0, %c4_i32_344 : i32
    %482 = arith.index_cast %481 : i32 to index
    %c7_345 = arith.constant 7 : index
    %483 = memref.load %arg1[%482, %c7_345] : memref<8x8xi32, #tpu.memory_space<smem>>
    %484 = arith.index_cast %483 : i32 to index
    %c0_346 = arith.constant 0 : index
    %485 = vector.load %arg2[%484, %c0_346] : memref<50x128xf32, #tpu.memory_space<vmem>>, vector<1x128xf32>
    %c7_347 = arith.constant 7 : index
    %c4_348 = arith.constant 4 : index
    %c0_349 = arith.constant 0 : index
    %486 = vector.load %arg5[%c7_347, %c4_348, %c0_349] : memref<8x8x128xf32, #tpu.memory_space<vmem>>, vector<1x1x128xf32>
    %487 = vector.shape_cast %486 : vector<1x1x128xf32> to vector<1x128xf32>
    %488 = vector.shape_cast %485 : vector<1x128xf32> to vector<1x1x128xf32>
    tpu.vector_store %arg5[%c7_347, %c4_348, %c0_349], %488 {strides = array<i32>} : memref<8x8x128xf32, #tpu.memory_space<vmem>>, vector<1x1x128xf32>,
    %c5_i32_350 = arith.constant 5 : i32
    %489 = arith.addi %0, %c5_i32_350 : i32
    %490 = arith.index_cast %489 : i32 to index
    %c7_351 = arith.constant 7 : index
    %491 = memref.load %arg1[%490, %c7_351] : memref<8x8xi32, #tpu.memory_space<smem>>
    %492 = arith.index_cast %491 : i32 to index
    %c0_352 = arith.constant 0 : index
    %493 = vector.load %arg2[%492, %c0_352] : memref<50x128xf32, #tpu.memory_space<vmem>>, vector<1x128xf32>
    %c7_353 = arith.constant 7 : index
    %c5_354 = arith.constant 5 : index
    %c0_355 = arith.constant 0 : index
    %494 = vector.load %arg5[%c7_353, %c5_354, %c0_355] : memref<8x8x128xf32, #tpu.memory_space<vmem>>, vector<1x1x128xf32>
    %495 = vector.shape_cast %494 : vector<1x1x128xf32> to vector<1x128xf32>
    %496 = vector.shape_cast %493 : vector<1x128xf32> to vector<1x1x128xf32>
    tpu.vector_store %arg5[%c7_353, %c5_354, %c0_355], %496 {strides = array<i32>} : memref<8x8x128xf32, #tpu.memory_space<vmem>>, vector<1x1x128xf32>,
    %c6_i32_356 = arith.constant 6 : i32
    %497 = arith.addi %0, %c6_i32_356 : i32
    %498 = arith.index_cast %497 : i32 to index
    %c7_357 = arith.constant 7 : index
    %499 = memref.load %arg1[%498, %c7_357] : memref<8x8xi32, #tpu.memory_space<smem>>
    %500 = arith.index_cast %499 : i32 to index
    %c0_358 = arith.constant 0 : index
    %501 = vector.load %arg2[%500, %c0_358] : memref<50x128xf32, #tpu.memory_space<vmem>>, vector<1x128xf32>
    %c7_359 = arith.constant 7 : index
    %c6_360 = arith.constant 6 : index
    %c0_361 = arith.constant 0 : index
    %502 = vector.load %arg5[%c7_359, %c6_360, %c0_361] : memref<8x8x128xf32, #tpu.memory_space<vmem>>, vector<1x1x128xf32>
    %503 = vector.shape_cast %502 : vector<1x1x128xf32> to vector<1x128xf32>
    %504 = vector.shape_cast %501 : vector<1x128xf32> to vector<1x1x128xf32>
    tpu.vector_store %arg5[%c7_359, %c6_360, %c0_361], %504 {strides = array<i32>} : memref<8x8x128xf32, #tpu.memory_space<vmem>>, vector<1x1x128xf32>,
    %c7_i32_362 = arith.constant 7 : i32
    %505 = arith.addi %0, %c7_i32_362 : i32
    %506 = arith.index_cast %505 : i32 to index
    %c7_363 = arith.constant 7 : index
    %507 = memref.load %arg1[%506, %c7_363] : memref<8x8xi32, #tpu.memory_space<smem>>
    %508 = arith.index_cast %507 : i32 to index
    %c0_364 = arith.constant 0 : index
    %509 = vector.load %arg2[%508, %c0_364] : memref<50x128xf32, #tpu.memory_space<vmem>>, vector<1x128xf32>
    %c7_365 = arith.constant 7 : index
    %c7_366 = arith.constant 7 : index
    %c0_367 = arith.constant 0 : index
    %510 = vector.load %arg5[%c7_365, %c7_366, %c0_367] : memref<8x8x128xf32, #tpu.memory_space<vmem>>, vector<1x1x128xf32>
    %511 = vector.shape_cast %510 : vector<1x1x128xf32> to vector<1x128xf32>
    %512 = vector.shape_cast %509 : vector<1x128xf32> to vector<1x1x128xf32>
    tpu.vector_store %arg5[%c7_365, %c7_366, %c0_367], %512 {strides = array<i32>} : memref<8x8x128xf32, #tpu.memory_space<vmem>>, vector<1x1x128xf32>,
    %c0_368 = arith.constant 0 : index
    %c0_369 = arith.constant 0 : index
    %513 = vector.load %arg3[%c0_368, %c0_369] : memref<128x128xf32, #tpu.memory_space<vmem>>, vector<128x128xf32>
    %c0_370 = arith.constant 0 : index
    %c0_371 = arith.constant 0 : index
    %c0_372 = arith.constant 0 : index
    %514 = vector.load %arg5[%c0_370, %c0_371, %c0_372] : memref<8x8x128xf32, #tpu.memory_space<vmem>>, vector<1x8x128xf32>
    %515 = vector.shape_cast %514 : vector<1x8x128xf32> to vector<8x128xf32>
    %516 = math.tanh %515 : vector<8x128xf32>
    %c1_i32_373 = arith.constant 1 : i32
    %517 = arith.index_cast %c1_i32_373 : i32 to index
    %c0_374 = arith.constant 0 : index
    %c0_375 = arith.constant 0 : index
    %518 = vector.load %arg5[%517, %c0_374, %c0_375] : memref<8x8x128xf32, #tpu.memory_space<vmem>>, vector<1x8x128xf32>
    %519 = vector.shape_cast %518 : vector<1x8x128xf32> to vector<8x128xf32>
    %cst = arith.constant dense<0.000000e+00> : vector<8x128xf32>
    %520 = tpu.matmul %516, %513, %cst {dimension_numbers = #tpu.dot_dimension_numbers<[1], [0], [0], [1], [0, 0, 1, 1], [], []>} : vector<8x128xf32>, vector<128x128xf32>, vector<8x128xf32> -> vector<8x128xf32>
    %521 = arith.addf %519, %520 : vector<8x128xf32>
    %522 = math.tanh %521 : vector<8x128xf32>
    %c2_i32_376 = arith.constant 2 : i32
    %523 = arith.index_cast %c2_i32_376 : i32 to index
    %c0_377 = arith.constant 0 : index
    %c0_378 = arith.constant 0 : index
    %524 = vector.load %arg5[%523, %c0_377, %c0_378] : memref<8x8x128xf32, #tpu.memory_space<vmem>>, vector<1x8x128xf32>
    %525 = vector.shape_cast %524 : vector<1x8x128xf32> to vector<8x128xf32>
    %cst_379 = arith.constant dense<0.000000e+00> : vector<8x128xf32>
    %526 = tpu.matmul %522, %513, %cst_379 {dimension_numbers = #tpu.dot_dimension_numbers<[1], [0], [0], [1], [0, 0, 1, 1], [], []>} : vector<8x128xf32>, vector<128x128xf32>, vector<8x128xf32> -> vector<8x128xf32>
    %527 = arith.addf %525, %526 : vector<8x128xf32>
    %528 = math.tanh %527 : vector<8x128xf32>
    %c3_i32_380 = arith.constant 3 : i32
    %529 = arith.index_cast %c3_i32_380 : i32 to index
    %c0_381 = arith.constant 0 : index
    %c0_382 = arith.constant 0 : index
    %530 = vector.load %arg5[%529, %c0_381, %c0_382] : memref<8x8x128xf32, #tpu.memory_space<vmem>>, vector<1x8x128xf32>
    %531 = vector.shape_cast %530 : vector<1x8x128xf32> to vector<8x128xf32>
    %cst_383 = arith.constant dense<0.000000e+00> : vector<8x128xf32>
    %532 = tpu.matmul %528, %513, %cst_383 {dimension_numbers = #tpu.dot_dimension_numbers<[1], [0], [0], [1], [0, 0, 1, 1], [], []>} : vector<8x128xf32>, vector<128x128xf32>, vector<8x128xf32> -> vector<8x128xf32>
    %533 = arith.addf %531, %532 : vector<8x128xf32>
    %534 = math.tanh %533 : vector<8x128xf32>
    %c4_i32_384 = arith.constant 4 : i32
    %535 = arith.index_cast %c4_i32_384 : i32 to index
    %c0_385 = arith.constant 0 : index
    %c0_386 = arith.constant 0 : index
    %536 = vector.load %arg5[%535, %c0_385, %c0_386] : memref<8x8x128xf32, #tpu.memory_space<vmem>>, vector<1x8x128xf32>
    %537 = vector.shape_cast %536 : vector<1x8x128xf32> to vector<8x128xf32>
    %cst_387 = arith.constant dense<0.000000e+00> : vector<8x128xf32>
    %538 = tpu.matmul %534, %513, %cst_387 {dimension_numbers = #tpu.dot_dimension_numbers<[1], [0], [0], [1], [0, 0, 1, 1], [], []>} : vector<8x128xf32>, vector<128x128xf32>, vector<8x128xf32> -> vector<8x128xf32>
    %539 = arith.addf %537, %538 : vector<8x128xf32>
    %540 = math.tanh %539 : vector<8x128xf32>
    %c5_i32_388 = arith.constant 5 : i32
    %541 = arith.index_cast %c5_i32_388 : i32 to index
    %c0_389 = arith.constant 0 : index
    %c0_390 = arith.constant 0 : index
    %542 = vector.load %arg5[%541, %c0_389, %c0_390] : memref<8x8x128xf32, #tpu.memory_space<vmem>>, vector<1x8x128xf32>
    %543 = vector.shape_cast %542 : vector<1x8x128xf32> to vector<8x128xf32>
    %cst_391 = arith.constant dense<0.000000e+00> : vector<8x128xf32>
    %544 = tpu.matmul %540, %513, %cst_391 {dimension_numbers = #tpu.dot_dimension_numbers<[1], [0], [0], [1], [0, 0, 1, 1], [], []>} : vector<8x128xf32>, vector<128x128xf32>, vector<8x128xf32> -> vector<8x128xf32>
    %545 = arith.addf %543, %544 : vector<8x128xf32>
    %546 = math.tanh %545 : vector<8x128xf32>
    %c6_i32_392 = arith.constant 6 : i32
    %547 = arith.index_cast %c6_i32_392 : i32 to index
    %c0_393 = arith.constant 0 : index
    %c0_394 = arith.constant 0 : index
    %548 = vector.load %arg5[%547, %c0_393, %c0_394] : memref<8x8x128xf32, #tpu.memory_space<vmem>>, vector<1x8x128xf32>
    %549 = vector.shape_cast %548 : vector<1x8x128xf32> to vector<8x128xf32>
    %cst_395 = arith.constant dense<0.000000e+00> : vector<8x128xf32>
    %550 = tpu.matmul %546, %513, %cst_395 {dimension_numbers = #tpu.dot_dimension_numbers<[1], [0], [0], [1], [0, 0, 1, 1], [], []>} : vector<8x128xf32>, vector<128x128xf32>, vector<8x128xf32> -> vector<8x128xf32>
    %551 = arith.addf %549, %550 : vector<8x128xf32>
    %552 = math.tanh %551 : vector<8x128xf32>
    %c7_i32_396 = arith.constant 7 : i32
    %553 = arith.index_cast %c7_i32_396 : i32 to index
    %c0_397 = arith.constant 0 : index
    %c0_398 = arith.constant 0 : index
    %554 = vector.load %arg5[%553, %c0_397, %c0_398] : memref<8x8x128xf32, #tpu.memory_space<vmem>>, vector<1x8x128xf32>
    %555 = vector.shape_cast %554 : vector<1x8x128xf32> to vector<8x128xf32>
    %cst_399 = arith.constant dense<0.000000e+00> : vector<8x128xf32>
    %556 = tpu.matmul %552, %513, %cst_399 {dimension_numbers = #tpu.dot_dimension_numbers<[1], [0], [0], [1], [0, 0, 1, 1], [], []>} : vector<8x128xf32>, vector<128x128xf32>, vector<8x128xf32> -> vector<8x128xf32>
    %557 = arith.addf %555, %556 : vector<8x128xf32>
    %558 = math.tanh %557 : vector<8x128xf32>
    %c7_i32_400 = arith.constant 7 : i32
    %c0_401 = arith.constant 0 : index
    %c0_402 = arith.constant 0 : index
    %559 = vector.load %arg4[%c0_401, %c0_402] : memref<8x128xf32, #tpu.memory_space<vmem>>, vector<8x128xf32>
    tpu.vector_store %arg4[%c0_401, %c0_402], %558 {strides = array<i32>} : memref<8x128xf32, #tpu.memory_space<vmem>>, vector<8x128xf32>,
    return
  }
  func.func @transform_0(%arg0: i32, %arg1: memref<8x8xi32, #tpu.memory_space<smem>>) -> (i32, i32) {
    %c0_i32 = arith.constant 0 : i32
    %c0_i32_0 = arith.constant 0 : i32
    %c0_i32_1 = arith.constant 0 : i32
    return %c0_i32, %c0_i32_0 : i32, i32
  }
  func.func @transform_1(%arg0: i32, %arg1: memref<8x8xi32, #tpu.memory_space<smem>>) -> (i32, i32) {
    %c0_i32 = arith.constant 0 : i32
    %c0_i32_0 = arith.constant 0 : i32
    %c0_i32_1 = arith.constant 0 : i32
    return %c0_i32, %c0_i32_0 : i32, i32
  }
  func.func @transform_2(%arg0: i32, %arg1: memref<8x8xi32, #tpu.memory_space<smem>>) -> (i32, i32) {
    %c0_i32 = arith.constant 0 : i32
    %c0_i32_0 = arith.constant 0 : i32
    return %arg0, %c0_i32 : i32, i32
  }
}

</mosaic_0001>

<llo_original>
// kernel: tpu_custom_call.1
$region0: #{tpu_custom_call.1}
  #allocation0 [shape = 'u32[]', space=smem, size = 0x4, offset = 0x4, fixed_abs, tag = 'smem constant byte address 0x4 - core index']
  #allocation1 [shape = 'u32[144,128]{1,0:T(1,128)}', space=vmem, size = 0x12000, scoped, tag = 'internal scratch']
  #allocation2 [shape = 'f32[8,8,128]{2,1,0:T(8,128)}', space=vmem, size = 0x8000, scoped, tag = 'scratch operand']
  #allocation3 [shape = 's32[1]{0}', space=sflag, size = 0x4, scoped, tag = 'scoped memory for tpu_custom_call.1']
  #allocation4 [shape = 'u8[4096]{0}', space=smem, size = 0x1000, scoped, tag = 'prefetched SMEM operand 0']
  %s0 = inlined_call_operand.hbm [shape: s32[8,8], index: 0, kind: input, shape index: {}]
  %s1 = inlined_call_operand.hbm [shape: f32[50,128], index: 1, kind: input, shape index: {}]
  %s2 = inlined_call_operand.hbm [shape: f32[128,128], index: 2, kind: input, shape index: {}]
  %s3 = inlined_call_operand.hbm [shape: f32[8,128], index: 3, kind: output, shape index: {}]
  %s4 = sld [smem:[#allocation0]]
  $region26: #{tpu_custom_call.1} parent=0
    _
  %s6 = ssub.s32 1, %s4
  %s7 = scalar_select 0, %s6, %s4
  %9 = dma.hbm_to_smem %s0, 128, [#allocation4], [#allocation3]
  %10 = dma.done [#allocation3], 128
  %11 = sfence
  $region1: #{tpu_custom_call.1} parent=0
    #allocation5 [shape = 'u8[28672]{0}', space=vmem, size = 0x7000, scoped, tag = 'input window, operand 1, single buffered']
    #allocation6 [shape = 's32[1]{0}', space=sflag, size = 0x4, scoped, tag = 'scoped memory for tpu_custom_call.1']
    #allocation7 [shape = 's32[1]{0}', space=sflag, size = 0x4, scoped, tag = 'scoped memory for tpu_custom_call.1']
    #allocation8 [shape = 'u8[65536]{0}', space=vmem, size = 0x10000, scoped, tag = 'input window, operand 2, single buffered']
    #allocation9 [shape = 's32[1]{0}', space=sflag, size = 0x4, scoped, tag = 'scoped memory for tpu_custom_call.1']
    #allocation10 [shape = 'u8[4096]{0}', space=vmem, size = 0x1000, scoped, tag = 'output window, operand 0, single buffered']
    %12 = vsyncpa [#allocation6], 0
    %13 = vsyncpa [#allocation9], 0
    %14 = vsyncpa [#allocation7], 0
    // Predicated region
    $region2: #{tpu_custom_call.1} parent=1 // pred_check
      _
    $region3: #{tpu_custom_call.1} parent=1 // pred_check_branch
      %16 = sbr.rel (0) target = $region5
    $region4: #{tpu_custom_call.1} parent=1 // pred_region
      %s18 = ssub.s32 896, 896
      %19 = vsyncadd [#allocation6], %s18
      %s20 = sshll.u32 [#allocation5], 4
      %s21 = int_to_ptr.vmem [resolvable:$true] %s20
      %26 = dma.hbm_to_vmem [thread:$0]  %s1, 896, %s21, [#allocation6], 128, 128, 8
    $region5: #{tpu_custom_call.1} parent=1 // pred_fallthru
      _
    // Predicated region
    $region6: #{tpu_custom_call.1} parent=1 // pred_check
      _
    $region7: #{tpu_custom_call.1} parent=1 // pred_check_branch
      %28 = sbr.rel (0) target = $region9
    $region8: #{tpu_custom_call.1} parent=1 // pred_region
      %s30 = ssub.s32 2048, 2048
      %31 = vsyncadd [#allocation9], %s30
      %s32 = sshll.u32 [#allocation8], 4
      %s33 = int_to_ptr.vmem [resolvable:$true] %s32
      %38 = dma.hbm_to_vmem [thread:$0]  %s2, 2048, %s33, [#allocation9], 128, 128, 8
    $region9: #{tpu_custom_call.1} parent=1 // pred_fallthru
      _
    // Predicated region
    $region10: #{tpu_custom_call.1} parent=1 // pred_check
      _
    $region11: #{tpu_custom_call.1} parent=1 // pred_check_branch
      %40 = sbr.rel (0) target = $region13
    $region12: #{tpu_custom_call.1} parent=1 // pred_region
      %41 = dma.done [#allocation6], 896
    $region13: #{tpu_custom_call.1} parent=1 // pred_fallthru
      _
    // Predicated region
    $region14: #{tpu_custom_call.1} parent=1 // pred_check
      _
    $region15: #{tpu_custom_call.1} parent=1 // pred_check_branch
      %43 = sbr.rel (0) target = $region17
    $region16: #{tpu_custom_call.1} parent=1 // pred_region
      %44 = dma.done [#allocation9], 2048
    $region17: #{tpu_custom_call.1} parent=1 // pred_fallthru
      _
    %s45 = smul.u32 0, 8
    %s46 = smul.u32 %s45, 128
    %s47 = sld [smem:[#allocation4 + %s46]]
    %s48 = scalar_lea.vmem [#allocation5], %s47
    %v49 = vld [vmem:[%s48] sm:$0x1]
    %50 = vst [vmem:[#allocation2] sm:$0x1] %v49
    %s51 = sadd.s32 %s45, 1
    %s52 = smul.u32 %s51, 128
    %s53 = sld [smem:[#allocation4 + %s52]]
    %s54 = scalar_lea.vmem [#allocation5], %s53
    %v55 = vld [vmem:[%s54] sm:$0x1]
    %56 = vst [vmem:[#allocation2 + $0x1] sm:$0x1] %v55
    %s57 = sadd.s32 %s45, 2
    %s58 = smul.u32 %s57, 128
    %s59 = sld [smem:[#allocation4 + %s58]]
    %s60 = scalar_lea.vmem [#allocation5], %s59
    %v61 = vld [vmem:[%s60] sm:$0x1]
    %62 = vst [vmem:[#allocation2 + $0x2] sm:$0x1] %v61
    %s63 = sadd.s32 %s45, 3
    %s64 = smul.u32 %s63, 128
    %s65 = sld [smem:[#allocation4 + %s64]]
    %s66 = scalar_lea.vmem [#allocation5], %s65
    %v67 = vld [vmem:[%s66] sm:$0x1]
    %68 = vst [vmem:[#allocation2 + $0x3] sm:$0x1] %v67
    %s69 = sadd.s32 %s45, 4
    %s70 = smul.u32 %s69, 128
    %s71 = sld [smem:[#allocation4 + %s70]]
    %s72 = scalar_lea.vmem [#allocation5], %s71
    %v73 = vld [vmem:[%s72] sm:$0x1]
    %74 = vst [vmem:[#allocation2 + $0x4] sm:$0x1] %v73
    %s75 = sadd.s32 %s45, 5
    %s76 = smul.u32 %s75, 128
    %s77 = sld [smem:[#allocation4 + %s76]]
    %s78 = scalar_lea.vmem [#allocation5], %s77
    %v79 = vld [vmem:[%s78] sm:$0x1]
    %80 = vst [vmem:[#allocation2 + $0x5] sm:$0x1] %v79
    %s81 = sadd.s32 %s45, 6
    %s82 = smul.u32 %s81, 128
    %s83 = sld [smem:[#allocation4 + %s82]]
    %s84 = scalar_lea.vmem [#allocation5], %s83
    %v85 = vld [vmem:[%s84] sm:$0x1]
    %86 = vst [vmem:[#allocation2 + $0x6] sm:$0x1] %v85
    %s87 = sadd.s32 %s45, 7
    %s88 = smul.u32 %s87, 128
    %s89 = sld [smem:[#allocation4 + %s88]]
    %s90 = scalar_lea.vmem [#allocation5], %s89
    %v91 = vld [vmem:[%s90] sm:$0x1]
    %92 = vst [vmem:[#allocation2 + $0x7] sm:$0x1] %v91
    %s93 = sadd.s32 %s46, 1
    %s94 = sld [smem:[#allocation4 + %s93]]
    %s95 = scalar_lea.vmem [#allocation5], %s94
    %v96 = vld [vmem:[%s95] sm:$0x1]
    %s97 = scalar_lea.vmem [#allocation2], 8
    %98 = vst [vmem:[%s97] sm:$0x1] %v96
    %s99 = sadd.s32 %s52, 1
    %s100 = sld [smem:[#allocation4 + %s99]]
    %s101 = scalar_lea.vmem [#allocation5], %s100
    %v102 = vld [vmem:[%s101] sm:$0x1]
    %103 = vst [vmem:[%s97 + $0x1] sm:$0x1] %v102
    %s104 = sadd.s32 %s58, 1
    %s105 = sld [smem:[#allocation4 + %s104]]
    %s106 = scalar_lea.vmem [#allocation5], %s105
    %v107 = vld [vmem:[%s106] sm:$0x1]
    %108 = vst [vmem:[%s97 + $0x2] sm:$0x1] %v107
    %s109 = sadd.s32 %s64, 1
    %s110 = sld [smem:[#allocation4 + %s109]]
    %s111 = scalar_lea.vmem [#allocation5], %s110
    %v112 = vld [vmem:[%s111] sm:$0x1]
    %113 = vst [vmem:[%s97 + $0x3] sm:$0x1] %v112
    %s114 = sadd.s32 %s70, 1
    %s115 = sld [smem:[#allocation4 + %s114]]
    %s116 = scalar_lea.vmem [#allocation5], %s115
    %v117 = vld [vmem:[%s116] sm:$0x1]
    %118 = vst [vmem:[%s97 + $0x4] sm:$0x1] %v117
    %s119 = sadd.s32 %s76, 1
    %s120 = sld [smem:[#allocation4 + %s119]]
    %s121 = scalar_lea.vmem [#allocation5], %s120
    %v122 = vld [vmem:[%s121] sm:$0x1]
    %123 = vst [vmem:[%s97 + $0x5] sm:$0x1] %v122
    %s124 = sadd.s32 %s82, 1
    %s125 = sld [smem:[#allocation4 + %s124]]
    %s126 = scalar_lea.vmem [#allocation5], %s125
    %v127 = vld [vmem:[%s126] sm:$0x1]
    %128 = vst [vmem:[%s97 + $0x6] sm:$0x1] %v127
    %s129 = sadd.s32 %s88, 1
    %s130 = sld [smem:[#allocation4 + %s129]]
    %s131 = scalar_lea.vmem [#allocation5], %s130
    %v132 = vld [vmem:[%s131] sm:$0x1]
    %133 = vst [vmem:[%s97 + $0x7] sm:$0x1] %v132
    %s134 = sadd.s32 %s46, 2
    %s135 = sld [smem:[#allocation4 + %s134]]
    %s136 = scalar_lea.vmem [#allocation5], %s135
    %v137 = vld [vmem:[%s136] sm:$0x1]
    %s138 = scalar_lea.vmem [#allocation2], 16
    %139 = vst [vmem:[%s138] sm:$0x1] %v137
    %s140 = sadd.s32 %s52, 2
    %s141 = sld [smem:[#allocation4 + %s140]]
    %s142 = scalar_lea.vmem [#allocation5], %s141
    %v143 = vld [vmem:[%s142] sm:$0x1]
    %144 = vst [vmem:[%s138 + $0x1] sm:$0x1] %v143
    %s145 = sadd.s32 %s58, 2
    %s146 = sld [smem:[#allocation4 + %s145]]
    %s147 = scalar_lea.vmem [#allocation5], %s146
    %v148 = vld [vmem:[%s147] sm:$0x1]
    %149 = vst [vmem:[%s138 + $0x2] sm:$0x1] %v148
    %s150 = sadd.s32 %s64, 2
    %s151 = sld [smem:[#allocation4 + %s150]]
    %s152 = scalar_lea.vmem [#allocation5], %s151
    %v153 = vld [vmem:[%s152] sm:$0x1]
    %154 = vst [vmem:[%s138 + $0x3] sm:$0x1] %v153
    %s155 = sadd.s32 %s70, 2
    %s156 = sld [smem:[#allocation4 + %s155]]
    %s157 = scalar_lea.vmem [#allocation5], %s156
    %v158 = vld [vmem:[%s157] sm:$0x1]
    %159 = vst [vmem:[%s138 + $0x4] sm:$0x1] %v158
    %s160 = sadd.s32 %s76, 2
    %s161 = sld [smem:[#allocation4 + %s160]]
    %s162 = scalar_lea.vmem [#allocation5], %s161
    %v163 = vld [vmem:[%s162] sm:$0x1]
    %164 = vst [vmem:[%s138 + $0x5] sm:$0x1] %v163
    %s165 = sadd.s32 %s82, 2
    %s166 = sld [smem:[#allocation4 + %s165]]
    %s167 = scalar_lea.vmem [#allocation5], %s166
    %v168 = vld [vmem:[%s167] sm:$0x1]
    %169 = vst [vmem:[%s138 + $0x6] sm:$0x1] %v168
    %s170 = sadd.s32 %s88, 2
    %s171 = sld [smem:[#allocation4 + %s170]]
    %s172 = scalar_lea.vmem [#allocation5], %s171
    %v173 = vld [vmem:[%s172] sm:$0x1]
    %174 = vst [vmem:[%s138 + $0x7] sm:$0x1] %v173
    %s175 = sadd.s32 %s46, 3
    %s176 = sld [smem:[#allocation4 + %s175]]
    %s177 = scalar_lea.vmem [#allocation5], %s176
    %v178 = vld [vmem:[%s177] sm:$0x1]
    %s179 = scalar_lea.vmem [#allocation2], 24
    %180 = vst [vmem:[%s179] sm:$0x1] %v178
    %s181 = sadd.s32 %s52, 3
    %s182 = sld [smem:[#allocation4 + %s181]]
    %s183 = scalar_lea.vmem [#allocation5], %s182
    %v184 = vld [vmem:[%s183] sm:$0x1]
    %185 = vst [vmem:[%s179 + $0x1] sm:$0x1] %v184
    %s186 = sadd.s32 %s58, 3
    %s187 = sld [smem:[#allocation4 + %s186]]
    %s188 = scalar_lea.vmem [#allocation5], %s187
    %v189 = vld [vmem:[%s188] sm:$0x1]
    %190 = vst [vmem:[%s179 + $0x2] sm:$0x1] %v189
    %s191 = sadd.s32 %s64, 3
    %s192 = sld [smem:[#allocation4 + %s191]]
    %s193 = scalar_lea.vmem [#allocation5], %s192
    %v194 = vld [vmem:[%s193] sm:$0x1]
    %195 = vst [vmem:[%s179 + $0x3] sm:$0x1] %v194
    %s196 = sadd.s32 %s70, 3
    %s197 = sld [smem:[#allocation4 + %s196]]
    %s198 = scalar_lea.vmem [#allocation5], %s197
    %v199 = vld [vmem:[%s198] sm:$0x1]
    %200 = vst [vmem:[%s179 + $0x4] sm:$0x1] %v199
    %s201 = sadd.s32 %s76, 3
    %s202 = sld [smem:[#allocation4 + %s201]]
    %s203 = scalar_lea.vmem [#allocation5], %s202
    %v204 = vld [vmem:[%s203] sm:$0x1]
    %205 = vst [vmem:[%s179 + $0x5] sm:$0x1] %v204
    %s206 = sadd.s32 %s82, 3
    %s207 = sld [smem:[#allocation4 + %s206]]
    %s208 = scalar_lea.vmem [#allocation5], %s207
    %v209 = vld [vmem:[%s208] sm:$0x1]
    %210 = vst [vmem:[%s179 + $0x6] sm:$0x1] %v209
    %s211 = sadd.s32 %s88, 3
    %s212 = sld [smem:[#allocation4 + %s211]]
    %s213 = scalar_lea.vmem [#allocation5], %s212
    %v214 = vld [vmem:[%s213] sm:$0x1]
    %215 = vst [vmem:[%s179 + $0x7] sm:$0x1] %v214
    %s216 = sadd.s32 %s46, 4
    %s217 = sld [smem:[#allocation4 + %s216]]
    %s218 = scalar_lea.vmem [#allocation5], %s217
    %v219 = vld [vmem:[%s218] sm:$0x1]
    %s220 = scalar_lea.vmem [#allocation2], 32
    %221 = vst [vmem:[%s220] sm:$0x1] %v219
    %s222 = sadd.s32 %s52, 4
    %s223 = sld [smem:[#allocation4 + %s222]]
    %s224 = scalar_lea.vmem [#allocation5], %s223
    %v225 = vld [vmem:[%s224] sm:$0x1]
    %226 = vst [vmem:[%s220 + $0x1] sm:$0x1] %v225
    %s227 = sadd.s32 %s58, 4
    %s228 = sld [smem:[#allocation4 + %s227]]
    %s229 = scalar_lea.vmem [#allocation5], %s228
    %v230 = vld [vmem:[%s229] sm:$0x1]
    %231 = vst [vmem:[%s220 + $0x2] sm:$0x1] %v230
    %s232 = sadd.s32 %s64, 4
    %s233 = sld [smem:[#allocation4 + %s232]]
    %s234 = scalar_lea.vmem [#allocation5], %s233
    %v235 = vld [vmem:[%s234] sm:$0x1]
    %236 = vst [vmem:[%s220 + $0x3] sm:$0x1] %v235
    %s237 = sadd.s32 %s70, 4
    %s238 = sld [smem:[#allocation4 + %s237]]
    %s239 = scalar_lea.vmem [#allocation5], %s238
    %v240 = vld [vmem:[%s239] sm:$0x1]
    %241 = vst [vmem:[%s220 + $0x4] sm:$0x1] %v240
    %s242 = sadd.s32 %s76, 4
    %s243 = sld [smem:[#allocation4 + %s242]]
    %s244 = scalar_lea.vmem [#allocation5], %s243
    %v245 = vld [vmem:[%s244] sm:$0x1]
    %246 = vst [vmem:[%s220 + $0x5] sm:$0x1] %v245
    %s247 = sadd.s32 %s82, 4
    %s248 = sld [smem:[#allocation4 + %s247]]
    %s249 = scalar_lea.vmem [#allocation5], %s248
    %v250 = vld [vmem:[%s249] sm:$0x1]
    %251 = vst [vmem:[%s220 + $0x6] sm:$0x1] %v250
    %s252 = sadd.s32 %s88, 4
    %s253 = sld [smem:[#allocation4 + %s252]]
    %s254 = scalar_lea.vmem [#allocation5], %s253
    %v255 = vld [vmem:[%s254] sm:$0x1]
    %256 = vst [vmem:[%s220 + $0x7] sm:$0x1] %v255
    %s257 = sadd.s32 %s46, 5
    %s258 = sld [smem:[#allocation4 + %s257]]
    %s259 = scalar_lea.vmem [#allocation5], %s258
    %v260 = vld [vmem:[%s259] sm:$0x1]
    %s261 = scalar_lea.vmem [#allocation2], 40
    %262 = vst [vmem:[%s261] sm:$0x1] %v260
    %s263 = sadd.s32 %s52, 5
    %s264 = sld [smem:[#allocation4 + %s263]]
    %s265 = scalar_lea.vmem [#allocation5], %s264
    %v266 = vld [vmem:[%s265] sm:$0x1]
    %267 = vst [vmem:[%s261 + $0x1] sm:$0x1] %v266
    %s268 = sadd.s32 %s58, 5
    %s269 = sld [smem:[#allocation4 + %s268]]
    %s270 = scalar_lea.vmem [#allocation5], %s269
    %v271 = vld [vmem:[%s270] sm:$0x1]
    %272 = vst [vmem:[%s261 + $0x2] sm:$0x1] %v271
    %s273 = sadd.s32 %s64, 5
    %s274 = sld [smem:[#allocation4 + %s273]]
    %s275 = scalar_lea.vmem [#allocation5], %s274
    %v276 = vld [vmem:[%s275] sm:$0x1]
    %277 = vst [vmem:[%s261 + $0x3] sm:$0x1] %v276
    %s278 = sadd.s32 %s70, 5
    %s279 = sld [smem:[#allocation4 + %s278]]
    %s280 = scalar_lea.vmem [#allocation5], %s279
    %v281 = vld [vmem:[%s280] sm:$0x1]
    %282 = vst [vmem:[%s261 + $0x4] sm:$0x1] %v281
    %s283 = sadd.s32 %s76, 5
    %s284 = sld [smem:[#allocation4 + %s283]]
    %s285 = scalar_lea.vmem [#allocation5], %s284
    %v286 = vld [vmem:[%s285] sm:$0x1]
    %287 = vst [vmem:[%s261 + $0x5] sm:$0x1] %v286
    %s288 = sadd.s32 %s82, 5
    %s289 = sld [smem:[#allocation4 + %s288]]
    %s290 = scalar_lea.vmem [#allocation5], %s289
    %v291 = vld [vmem:[%s290] sm:$0x1]
    %292 = vst [vmem:[%s261 + $0x6] sm:$0x1] %v291
    %s293 = sadd.s32 %s88, 5
    %s294 = sld [smem:[#allocation4 + %s293]]
    %s295 = scalar_lea.vmem [#allocation5], %s294
    %v296 = vld [vmem:[%s295] sm:$0x1]
    %297 = vst [vmem:[%s261 + $0x7] sm:$0x1] %v296
    %s298 = sadd.s32 %s46, 6
    %s299 = sld [smem:[#allocation4 + %s298]]
    %s300 = scalar_lea.vmem [#allocation5], %s299
    %v301 = vld [vmem:[%s300] sm:$0x1]
    %s302 = scalar_lea.vmem [#allocation2], 48
    %303 = vst [vmem:[%s302] sm:$0x1] %v301
    %s304 = sadd.s32 %s52, 6
    %s305 = sld [smem:[#allocation4 + %s304]]
    %s306 = scalar_lea.vmem [#allocation5], %s305
    %v307 = vld [vmem:[%s306] sm:$0x1]
    %308 = vst [vmem:[%s302 + $0x1] sm:$0x1] %v307
    %s309 = sadd.s32 %s58, 6
    %s310 = sld [smem:[#allocation4 + %s309]]
    %s311 = scalar_lea.vmem [#allocation5], %s310
    %v312 = vld [vmem:[%s311] sm:$0x1]
    %313 = vst [vmem:[%s302 + $0x2] sm:$0x1] %v312
    %s314 = sadd.s32 %s64, 6
    %s315 = sld [smem:[#allocation4 + %s314]]
    %s316 = scalar_lea.vmem [#allocation5], %s315
    %v317 = vld [vmem:[%s316] sm:$0x1]
    %318 = vst [vmem:[%s302 + $0x3] sm:$0x1] %v317
    %s319 = sadd.s32 %s70, 6
    %s320 = sld [smem:[#allocation4 + %s319]]
    %s321 = scalar_lea.vmem [#allocation5], %s320
    %v322 = vld [vmem:[%s321] sm:$0x1]
    %323 = vst [vmem:[%s302 + $0x4] sm:$0x1] %v322
    %s324 = sadd.s32 %s76, 6
    %s325 = sld [smem:[#allocation4 + %s324]]
    %s326 = scalar_lea.vmem [#allocation5], %s325
    %v327 = vld [vmem:[%s326] sm:$0x1]
    %328 = vst [vmem:[%s302 + $0x5] sm:$0x1] %v327
    %s329 = sadd.s32 %s82, 6
    %s330 = sld [smem:[#allocation4 + %s329]]
    %s331 = scalar_lea.vmem [#allocation5], %s330
    %v332 = vld [vmem:[%s331] sm:$0x1]
    %333 = vst [vmem:[%s302 + $0x6] sm:$0x1] %v332
    %s334 = sadd.s32 %s88, 6
    %s335 = sld [smem:[#allocation4 + %s334]]
    %s336 = scalar_lea.vmem [#allocation5], %s335
    %v337 = vld [vmem:[%s336] sm:$0x1]
    %338 = vst [vmem:[%s302 + $0x7] sm:$0x1] %v337
    %s339 = sadd.s32 %s46, 7
    %s340 = sld [smem:[#allocation4 + %s339]]
    %s341 = scalar_lea.vmem [#allocation5], %s340
    %v342 = vld [vmem:[%s341] sm:$0x1]
    %s343 = scalar_lea.vmem [#allocation2], 56
    %344 = vst [vmem:[%s343] sm:$0x1] %v342
    %s345 = sadd.s32 %s52, 7
    %s346 = sld [smem:[#allocation4 + %s345]]
    %s347 = scalar_lea.vmem [#allocation5], %s346
    %v348 = vld [vmem:[%s347] sm:$0x1]
    %349 = vst [vmem:[%s343 + $0x1] sm:$0x1] %v348
    %s350 = sadd.s32 %s58, 7
    %s351 = sld [smem:[#allocation4 + %s350]]
    %s352 = scalar_lea.vmem [#allocation5], %s351
    %v353 = vld [vmem:[%s352] sm:$0x1]
    %354 = vst [vmem:[%s343 + $0x2] sm:$0x1] %v353
    %s355 = sadd.s32 %s64, 7
    %s356 = sld [smem:[#allocation4 + %s355]]
    %s357 = scalar_lea.vmem [#allocation5], %s356
    %v358 = vld [vmem:[%s357] sm:$0x1]
    %359 = vst [vmem:[%s343 + $0x3] sm:$0x1] %v358
    %s360 = sadd.s32 %s70, 7
    %s361 = sld [smem:[#allocation4 + %s360]]
    %s362 = scalar_lea.vmem [#allocation5], %s361
    %v363 = vld [vmem:[%s362] sm:$0x1]
    %364 = vst [vmem:[%s343 + $0x4] sm:$0x1] %v363
    %s365 = sadd.s32 %s76, 7
    %s366 = sld [smem:[#allocation4 + %s365]]
    %s367 = scalar_lea.vmem [#allocation5], %s366
    %v368 = vld [vmem:[%s367] sm:$0x1]
    %369 = vst [vmem:[%s343 + $0x5] sm:$0x1] %v368
    %s370 = sadd.s32 %s82, 7
    %s371 = sld [smem:[#allocation4 + %s370]]
    %s372 = scalar_lea.vmem [#allocation5], %s371
    %v373 = vld [vmem:[%s372] sm:$0x1]
    %374 = vst [vmem:[%s343 + $0x6] sm:$0x1] %v373
    %s375 = sadd.s32 %s88, 7
    %s376 = sld [smem:[#allocation4 + %s375]]
    %s377 = scalar_lea.vmem [#allocation5], %s376
    %v378 = vld [vmem:[%s377] sm:$0x1]
    %379 = vst [vmem:[%s343 + $0x7] sm:$0x1] %v378
    %v380 = vld [vmem:[#allocation8] sm:$0xff]
    %v381 = vld [vmem:[#allocation8 + $0x8] sm:$0xff]
    %v382 = vld [vmem:[#allocation8 + $0x10] sm:$0xff]
    %v383 = vld [vmem:[#allocation8 + $0x18] sm:$0xff]
    %v384 = vld [vmem:[#allocation8 + $0x20] sm:$0xff]
    %v385 = vld [vmem:[#allocation8 + $0x28] sm:$0xff]
    %v386 = vld [vmem:[#allocation8 + $0x30] sm:$0xff]
    %v387 = vld [vmem:[#allocation8 + $0x38] sm:$0xff]
    %v388 = vld [vmem:[#allocation8 + $0x40] sm:$0xff]
    %v389 = vld [vmem:[#allocation8 + $0x48] sm:$0xff]
    %v390 = vld [vmem:[#allocation8 + $0x50] sm:$0xff]
    %v391 = vld [vmem:[#allocation8 + $0x58] sm:$0xff]
    %v392 = vld [vmem:[#allocation8 + $0x60] sm:$0xff]
    %v393 = vld [vmem:[#allocation8 + $0x68] sm:$0xff]
    %v394 = vld [vmem:[#allocation8 + $0x70] sm:$0xff]
    %v395 = vld [vmem:[#allocation8 + $0x78] sm:$0xff]
    %v396 = vld [vmem:[#allocation2] sm:$0xff]
    %v397 = vtanh.pop %v396
    %v398 = vld [vmem:[%s97] sm:$0xff]
    %399 = vmatprep.subr.mxu0 0.0
    %400 = vmatpush1.msra.mxu0 %v380
    %401 = vmatprep.subr.mxu0 0.0
    %402 = vmatpush1.msra.mxu0 %v381
    %403 = vmatprep.subr.mxu0 0.0
    %404 = vmatpush1.msra.mxu0 %v382
    %405 = vmatprep.subr.mxu0 0.0
    %406 = vmatpush1.msra.mxu0 %v383
    %407 = vmatprep.subr.mxu0 0.0
    %408 = vmatpush1.msra.mxu0 %v384
    %409 = vmatprep.subr.mxu0 0.0
    %410 = vmatpush1.msra.mxu0 %v385
    %411 = vmatprep.subr.mxu0 0.0
    %412 = vmatpush1.msra.mxu0 %v386
    %413 = vmatprep.subr.mxu0 0.0
    %414 = vmatpush1.msra.mxu0 %v387
    %415 = vmatprep.subr.mxu0 0.0
    %416 = vmatpush1.msra.mxu0 %v388
    %417 = vmatprep.subr.mxu0 0.0
    %418 = vmatpush1.msra.mxu0 %v389
    %419 = vmatprep.subr.mxu0 0.0
    %420 = vmatpush1.msra.mxu0 %v390
    %421 = vmatprep.subr.mxu0 0.0
    %422 = vmatpush1.msra.mxu0 %v391
    %423 = vmatprep.subr.mxu0 0.0
    %424 = vmatpush1.msra.mxu0 %v392
    %425 = vmatprep.subr.mxu0 0.0
    %426 = vmatpush1.msra.mxu0 %v393
    %427 = vmatprep.subr.mxu0 0.0
    %428 = vmatpush1.msra.mxu0 %v394
    %429 = vmatprep.subr.mxu0 0.0
    %430 = vmatpush1.msra.mxu0 %v395
    %431 = vmatprep.subr.mxu0 0.0
    %432 = vmatpush1.msra.mxu0 0.0
    %433 = vmatprep.subr.mxu0 0.0
    %434 = vmatpush1.msra.mxu0 0.0
    %435 = vmatprep.subr.mxu0 0.0
    %436 = vmatpush1.msra.mxu0 0.0
    %437 = vmatprep.subr.mxu0 0.0
    %438 = vmatpush1.msra.mxu0 0.0
    %439 = vmatprep.subr.mxu0 0.0
    %440 = vmatpush1.msra.mxu0 0.0
    %441 = vmatprep.subr.mxu0 0.0
    %442 = vmatpush1.msra.mxu0 0.0
    %443 = vmatprep.subr.mxu0 0.0
    %444 = vmatpush1.msra.mxu0 0.0
    %445 = vmatprep.subr.mxu0 0.0
    %446 = vmatpush1.msra.mxu0 0.0
    %447 = vmatprep.subr.mxu0 0.0
    %448 = vmatpush1.msra.mxu0 0.0
    %449 = vmatprep.subr.mxu0 0.0
    %450 = vmatpush1.msra.mxu0 0.0
    %451 = vmatprep.subr.mxu0 0.0
    %452 = vmatpush1.msra.mxu0 0.0
    %453 = vmatprep.subr.mxu0 0.0
    %454 = vmatpush1.msra.mxu0 0.0
    %455 = vmatprep.subr.mxu0 0.0
    %456 = vmatpush1.msra.mxu0 0.0
    %457 = vmatprep.subr.mxu0 0.0
    %458 = vmatpush1.msra.mxu0 0.0
    %459 = vmatprep.subr.mxu0 0.0
    %460 = vmatpush1.msra.mxu0 0.0
    %461 = vmatprep.subr.mxu0 0.0
    %462 = vmatpush1.msra.mxu0 0.0
    %463 = vmatprep.mubr.f32.mxu0 0.0
    %464 = vmatmul.mubr.f32.gmra.mrb[0].mxu0 %v397
    %v465 = vpop.f32.mrb[0].mxu0
    %v466 = vadd.f32 0.0, %v465
    %v467 = vpop.f32.mrb[0].mxu0
    %468 = vdwg.mxu0
    %v469 = vadd.f32 %v398, %v466
    %v470 = vtanh.pop %v469
    %v471 = vld [vmem:[%s138] sm:$0xff]
    %472 = vmatprep.subr.mxu0 0.0
    %473 = vmatpush1.msra.mxu0 %v380
    %474 = vmatprep.subr.mxu0 0.0
    %475 = vmatpush1.msra.mxu0 %v381
    %476 = vmatprep.subr.mxu0 0.0
    %477 = vmatpush1.msra.mxu0 %v382
    %478 = vmatprep.subr.mxu0 0.0
    %479 = vmatpush1.msra.mxu0 %v383
    %480 = vmatprep.subr.mxu0 0.0
    %481 = vmatpush1.msra.mxu0 %v384
    %482 = vmatprep.subr.mxu0 0.0
    %483 = vmatpush1.msra.mxu0 %v385
    %484 = vmatprep.subr.mxu0 0.0
    %485 = vmatpush1.msra.mxu0 %v386
    %486 = vmatprep.subr.mxu0 0.0
    %487 = vmatpush1.msra.mxu0 %v387
    %488 = vmatprep.subr.mxu0 0.0
    %489 = vmatpush1.msra.mxu0 %v388
    %490 = vmatprep.subr.mxu0 0.0
    %491 = vmatpush1.msra.mxu0 %v389
    %492 = vmatprep.subr.mxu0 0.0
    %493 = vmatpush1.msra.mxu0 %v390
    %494 = vmatprep.subr.mxu0 0.0
    %495 = vmatpush1.msra.mxu0 %v391
    %496 = vmatprep.subr.mxu0 0.0
    %497 = vmatpush1.msra.mxu0 %v392
    %498 = vmatprep.subr.mxu0 0.0
    %499 = vmatpush1.msra.mxu0 %v393
    %500 = vmatprep.subr.mxu0 0.0
    %501 = vmatpush1.msra.mxu0 %v394
    %502 = vmatprep.subr.mxu0 0.0
    %503 = vmatpush1.msra.mxu0 %v395
    %504 = vmatprep.subr.mxu0 0.0
    %505 = vmatpush1.msra.mxu0 0.0
    %506 = vmatprep.subr.mxu0 0.0
    %507 = vmatpush1.msra.mxu0 0.0
    %508 = vmatprep.subr.mxu0 0.0
    %509 = vmatpush1.msra.mxu0 0.0
    %510 = vmatprep.subr.mxu0 0.0
    %511 = vmatpush1.msra.mxu0 0.0
    %512 = vmatprep.subr.mxu0 0.0
    %513 = vmatpush1.msra.mxu0 0.0
    %514 = vmatprep.subr.mxu0 0.0
    %515 = vmatpush1.msra.mxu0 0.0
    %516 = vmatprep.subr.mxu0 0.0
    %517 = vmatpush1.msra.mxu0 0.0
    %518 = vmatprep.subr.mxu0 0.0
    %519 = vmatpush1.msra.mxu0 0.0
    %520 = vmatprep.subr.mxu0 0.0
    %521 = vmatpush1.msra.mxu0 0.0
    %522 = vmatprep.subr.mxu0 0.0
    %523 = vmatpush1.msra.mxu0 0.0
    %524 = vmatprep.subr.mxu0 0.0
    %525 = vmatpush1.msra.mxu0 0.0
    %526 = vmatprep.subr.mxu0 0.0
    %527 = vmatpush1.msra.mxu0 0.0
    %528 = vmatprep.subr.mxu0 0.0
    %529 = vmatpush1.msra.mxu0 0.0
    %530 = vmatprep.subr.mxu0 0.0
    %531 = vmatpush1.msra.mxu0 0.0
    %532 = vmatprep.subr.mxu0 0.0
    %533 = vmatpush1.msra.mxu0 0.0
    %534 = vmatprep.subr.mxu0 0.0
    %535 = vmatpush1.msra.mxu0 0.0
    %536 = vmatprep.mubr.f32.mxu0 0.0
    %537 = vmatmul.mubr.f32.gmra.mrb[0].mxu0 %v470
    %v538 = vpop.f32.mrb[0].mxu0
    %v539 = vadd.f32 0.0, %v538
    %v540 = vpop.f32.mrb[0].mxu0
    %541 = vdwg.mxu0
    %v542 = vadd.f32 %v471, %v539
    %v543 = vtanh.pop %v542
    %v544 = vld [vmem:[%s179] sm:$0xff]
    %545 = vmatprep.subr.mxu0 0.0
    %546 = vmatpush1.msra.mxu0 %v380
    %547 = vmatprep.subr.mxu0 0.0
    %548 = vmatpush1.msra.mxu0 %v381
    %549 = vmatprep.subr.mxu0 0.0
    %550 = vmatpush1.msra.mxu0 %v382
    %551 = vmatprep.subr.mxu0 0.0
    %552 = vmatpush1.msra.mxu0 %v383
    %553 = vmatprep.subr.mxu0 0.0
    %554 = vmatpush1.msra.mxu0 %v384
    %555 = vmatprep.subr.mxu0 0.0
    %556 = vmatpush1.msra.mxu0 %v385
    %557 = vmatprep.subr.mxu0 0.0
    %558 = vmatpush1.msra.mxu0 %v386
    %559 = vmatprep.subr.mxu0 0.0
    %560 = vmatpush1.msra.mxu0 %v387
    %561 = vmatprep.subr.mxu0 0.0
    %562 = vmatpush1.msra.mxu0 %v388
    %563 = vmatprep.subr.mxu0 0.0
    %564 = vmatpush1.msra.mxu0 %v389
    %565 = vmatprep.subr.mxu0 0.0
    %566 = vmatpush1.msra.mxu0 %v390
    %567 = vmatprep.subr.mxu0 0.0
    %568 = vmatpush1.msra.mxu0 %v391
    %569 = vmatprep.subr.mxu0 0.0
    %570 = vmatpush1.msra.mxu0 %v392
    %571 = vmatprep.subr.mxu0 0.0
    %572 = vmatpush1.msra.mxu0 %v393
    %573 = vmatprep.subr.mxu0 0.0
    %574 = vmatpush1.msra.mxu0 %v394
    %575 = vmatprep.subr.mxu0 0.0
    %576 = vmatpush1.msra.mxu0 %v395
    %577 = vmatprep.subr.mxu0 0.0
    %578 = vmatpush1.msra.mxu0 0.0
    %579 = vmatprep.subr.mxu0 0.0
    %580 = vmatpush1.msra.mxu0 0.0
    %581 = vmatprep.subr.mxu0 0.0
    %582 = vmatpush1.msra.mxu0 0.0
    %583 = vmatprep.subr.mxu0 0.0
    %584 = vmatpush1.msra.mxu0 0.0
    %585 = vmatprep.subr.mxu0 0.0
    %586 = vmatpush1.msra.mxu0 0.0
    %587 = vmatprep.subr.mxu0 0.0
    %588 = vmatpush1.msra.mxu0 0.0
    %589 = vmatprep.subr.mxu0 0.0
    %590 = vmatpush1.msra.mxu0 0.0
    %591 = vmatprep.subr.mxu0 0.0
    %592 = vmatpush1.msra.mxu0 0.0
    %593 = vmatprep.subr.mxu0 0.0
    %594 = vmatpush1.msra.mxu0 0.0
    %595 = vmatprep.subr.mxu0 0.0
    %596 = vmatpush1.msra.mxu0 0.0
    %597 = vmatprep.subr.mxu0 0.0
    %598 = vmatpush1.msra.mxu0 0.0
    %599 = vmatprep.subr.mxu0 0.0
    %600 = vmatpush1.msra.mxu0 0.0
    %601 = vmatprep.subr.mxu0 0.0
    %602 = vmatpush1.msra.mxu0 0.0
    %603 = vmatprep.subr.mxu0 0.0
    %604 = vmatpush1.msra.mxu0 0.0
    %605 = vmatprep.subr.mxu0 0.0
    %606 = vmatpush1.msra.mxu0 0.0
    %607 = vmatprep.subr.mxu0 0.0
    %608 = vmatpush1.msra.mxu0 0.0
    %609 = vmatprep.mubr.f32.mxu0 0.0
    %610 = vmatmul.mubr.f32.gmra.mrb[0].mxu0 %v543
    %v611 = vpop.f32.mrb[0].mxu0
    %v612 = vadd.f32 0.0, %v611
    %v613 = vpop.f32.mrb[0].mxu0
    %614 = vdwg.mxu0
    %v615 = vadd.f32 %v544, %v612
    %v616 = vtanh.pop %v615
    %v617 = vld [vmem:[%s220] sm:$0xff]
    %618 = vmatprep.subr.mxu0 0.0
    %619 = vmatpush1.msra.mxu0 %v380
    %620 = vmatprep.subr.mxu0 0.0
    %621 = vmatpush1.msra.mxu0 %v381
    %622 = vmatprep.subr.mxu0 0.0
    %623 = vmatpush1.msra.mxu0 %v382
    %624 = vmatprep.subr.mxu0 0.0
    %625 = vmatpush1.msra.mxu0 %v383
    %626 = vmatprep.subr.mxu0 0.0
    %627 = vmatpush1.msra.mxu0 %v384
    %628 = vmatprep.subr.mxu0 0.0
    %629 = vmatpush1.msra.mxu0 %v385
    %630 = vmatprep.subr.mxu0 0.0
    %631 = vmatpush1.msra.mxu0 %v386
    %632 = vmatprep.subr.mxu0 0.0
    %633 = vmatpush1.msra.mxu0 %v387
    %634 = vmatprep.subr.mxu0 0.0
    %635 = vmatpush1.msra.mxu0 %v388
    %636 = vmatprep.subr.mxu0 0.0
    %637 = vmatpush1.msra.mxu0 %v389
    %638 = vmatprep.subr.mxu0 0.0
    %639 = vmatpush1.msra.mxu0 %v390
    %640 = vmatprep.subr.mxu0 0.0
    %641 = vmatpush1.msra.mxu0 %v391
    %642 = vmatprep.subr.mxu0 0.0
    %643 = vmatpush1.msra.mxu0 %v392
    %644 = vmatprep.subr.mxu0 0.0
    %645 = vmatpush1.msra.mxu0 %v393
    %646 = vmatprep.subr.mxu0 0.0
    %647 = vmatpush1.msra.mxu0 %v394
    %648 = vmatprep.subr.mxu0 0.0
    %649 = vmatpush1.msra.mxu0 %v395
    %650 = vmatprep.subr.mxu0 0.0
    %651 = vmatpush1.msra.mxu0 0.0
    %652 = vmatprep.subr.mxu0 0.0
    %653 = vmatpush1.msra.mxu0 0.0
    %654 = vmatprep.subr.mxu0 0.0
    %655 = vmatpush1.msra.mxu0 0.0
    %656 = vmatprep.subr.mxu0 0.0
    %657 = vmatpush1.msra.mxu0 0.0
    %658 = vmatprep.subr.mxu0 0.0
    %659 = vmatpush1.msra.mxu0 0.0
    %660 = vmatprep.subr.mxu0 0.0
    %661 = vmatpush1.msra.mxu0 0.0
    %662 = vmatprep.subr.mxu0 0.0
    %663 = vmatpush1.msra.mxu0 0.0
    %664 = vmatprep.subr.mxu0 0.0
    %665 = vmatpush1.msra.mxu0 0.0
    %666 = vmatprep.subr.mxu0 0.0
    %667 = vmatpush1.msra.mxu0 0.0
    %668 = vmatprep.subr.mxu0 0.0
    %669 = vmatpush1.msra.mxu0 0.0
    %670 = vmatprep.subr.mxu0 0.0
    %671 = vmatpush1.msra.mxu0 0.0
    %672 = vmatprep.subr.mxu0 0.0
    %673 = vmatpush1.msra.mxu0 0.0
    %674 = vmatprep.subr.mxu0 0.0
    %675 = vmatpush1.msra.mxu0 0.0
    %676 = vmatprep.subr.mxu0 0.0
    %677 = vmatpush1.msra.mxu0 0.0
    %678 = vmatprep.subr.mxu0 0.0
    %679 = vmatpush1.msra.mxu0 0.0
    %680 = vmatprep.subr.mxu0 0.0
    %681 = vmatpush1.msra.mxu0 0.0
    %682 = vmatprep.mubr.f32.mxu0 0.0
    %683 = vmatmul.mubr.f32.gmra.mrb[0].mxu0 %v616
    %v684 = vpop.f32.mrb[0].mxu0
    %v685 = vadd.f32 0.0, %v684
    %v686 = vpop.f32.mrb[0].mxu0
    %687 = vdwg.mxu0
    %v688 = vadd.f32 %v617, %v685
    %v689 = vtanh.pop %v688
    %v690 = vld [vmem:[%s261] sm:$0xff]
    %691 = vmatprep.subr.mxu0 0.0
    %692 = vmatpush1.msra.mxu0 %v380
    %693 = vmatprep.subr.mxu0 0.0
    %694 = vmatpush1.msra.mxu0 %v381
    %695 = vmatprep.subr.mxu0 0.0
    %696 = vmatpush1.msra.mxu0 %v382
    %697 = vmatprep.subr.mxu0 0.0
    %698 = vmatpush1.msra.mxu0 %v383
    %699 = vmatprep.subr.mxu0 0.0
    %700 = vmatpush1.msra.mxu0 %v384
    %701 = vmatprep.subr.mxu0 0.0
    %702 = vmatpush1.msra.mxu0 %v385
    %703 = vmatprep.subr.mxu0 0.0
    %704 = vmatpush1.msra.mxu0 %v386
    %705 = vmatprep.subr.mxu0 0.0
    %706 = vmatpush1.msra.mxu0 %v387
    %707 = vmatprep.subr.mxu0 0.0
    %708 = vmatpush1.msra.mxu0 %v388
    %709 = vmatprep.subr.mxu0 0.0
    %710 = vmatpush1.msra.mxu0 %v389
    %711 = vmatprep.subr.mxu0 0.0
    %712 = vmatpush1.msra.mxu0 %v390
    %713 = vmatprep.subr.mxu0 0.0
    %714 = vmatpush1.msra.mxu0 %v391
    %715 = vmatprep.subr.mxu0 0.0
    %716 = vmatpush1.msra.mxu0 %v392
    %717 = vmatprep.subr.mxu0 0.0
    %718 = vmatpush1.msra.mxu0 %v393
    %719 = vmatprep.subr.mxu0 0.0
    %720 = vmatpush1.msra.mxu0 %v394
    %721 = vmatprep.subr.mxu0 0.0
    %722 = vmatpush1.msra.mxu0 %v395
    %723 = vmatprep.subr.mxu0 0.0
    %724 = vmatpush1.msra.mxu0 0.0
    %725 = vmatprep.subr.mxu0 0.0
    %726 = vmatpush1.msra.mxu0 0.0
    %727 = vmatprep.subr.mxu0 0.0
    %728 = vmatpush1.msra.mxu0 0.0
    %729 = vmatprep.subr.mxu0 0.0
    %730 = vmatpush1.msra.mxu0 0.0
    %731 = vmatprep.subr.mxu0 0.0
    %732 = vmatpush1.msra.mxu0 0.0
    %733 = vmatprep.subr.mxu0 0.0
    %734 = vmatpush1.msra.mxu0 0.0
    %735 = vmatprep.subr.mxu0 0.0
    %736 = vmatpush1.msra.mxu0 0.0
    %737 = vmatprep.subr.mxu0 0.0
    %738 = vmatpush1.msra.mxu0 0.0
    %739 = vmatprep.subr.mxu0 0.0
    %740 = vmatpush1.msra.mxu0 0.0
    %741 = vmatprep.subr.mxu0 0.0
    %742 = vmatpush1.msra.mxu0 0.0
    %743 = vmatprep.subr.mxu0 0.0
    %744 = vmatpush1.msra.mxu0 0.0
    %745 = vmatprep.subr.mxu0 0.0
    %746 = vmatpush1.msra.mxu0 0.0
    %747 = vmatprep.subr.mxu0 0.0
    %748 = vmatpush1.msra.mxu0 0.0
    %749 = vmatprep.subr.mxu0 0.0
    %750 = vmatpush1.msra.mxu0 0.0
    %751 = vmatprep.subr.mxu0 0.0
    %752 = vmatpush1.msra.mxu0 0.0
    %753 = vmatprep.subr.mxu0 0.0
    %754 = vmatpush1.msra.mxu0 0.0
    %755 = vmatprep.mubr.f32.mxu0 0.0
    %756 = vmatmul.mubr.f32.gmra.mrb[0].mxu0 %v689
    %v757 = vpop.f32.mrb[0].mxu0
    %v758 = vadd.f32 0.0, %v757
    %v759 = vpop.f32.mrb[0].mxu0
    %760 = vdwg.mxu0
    %v761 = vadd.f32 %v690, %v758
    %v762 = vtanh.pop %v761
    %v763 = vld [vmem:[%s302] sm:$0xff]
    %764 = vmatprep.subr.mxu0 0.0
    %765 = vmatpush1.msra.mxu0 %v380
    %766 = vmatprep.subr.mxu0 0.0
    %767 = vmatpush1.msra.mxu0 %v381
    %768 = vmatprep.subr.mxu0 0.0
    %769 = vmatpush1.msra.mxu0 %v382
    %770 = vmatprep.subr.mxu0 0.0
    %771 = vmatpush1.msra.mxu0 %v383
    %772 = vmatprep.subr.mxu0 0.0
    %773 = vmatpush1.msra.mxu0 %v384
    %774 = vmatprep.subr.mxu0 0.0
    %775 = vmatpush1.msra.mxu0 %v385
    %776 = vmatprep.subr.mxu0 0.0
    %777 = vmatpush1.msra.mxu0 %v386
    %778 = vmatprep.subr.mxu0 0.0
    %779 = vmatpush1.msra.mxu0 %v387
    %780 = vmatprep.subr.mxu0 0.0
    %781 = vmatpush1.msra.mxu0 %v388
    %782 = vmatprep.subr.mxu0 0.0
    %783 = vmatpush1.msra.mxu0 %v389
    %784 = vmatprep.subr.mxu0 0.0
    %785 = vmatpush1.msra.mxu0 %v390
    %786 = vmatprep.subr.mxu0 0.0
    %787 = vmatpush1.msra.mxu0 %v391
    %788 = vmatprep.subr.mxu0 0.0
    %789 = vmatpush1.msra.mxu0 %v392
    %790 = vmatprep.subr.mxu0 0.0
    %791 = vmatpush1.msra.mxu0 %v393
    %792 = vmatprep.subr.mxu0 0.0
    %793 = vmatpush1.msra.mxu0 %v394
    %794 = vmatprep.subr.mxu0 0.0
    %795 = vmatpush1.msra.mxu0 %v395
    %796 = vmatprep.subr.mxu0 0.0
    %797 = vmatpush1.msra.mxu0 0.0
    %798 = vmatprep.subr.mxu0 0.0
    %799 = vmatpush1.msra.mxu0 0.0
    %800 = vmatprep.subr.mxu0 0.0
    %801 = vmatpush1.msra.mxu0 0.0
    %802 = vmatprep.subr.mxu0 0.0
    %803 = vmatpush1.msra.mxu0 0.0
    %804 = vmatprep.subr.mxu0 0.0
    %805 = vmatpush1.msra.mxu0 0.0
    %806 = vmatprep.subr.mxu0 0.0
    %807 = vmatpush1.msra.mxu0 0.0
    %808 = vmatprep.subr.mxu0 0.0
    %809 = vmatpush1.msra.mxu0 0.0
    %810 = vmatprep.subr.mxu0 0.0
    %811 = vmatpush1.msra.mxu0 0.0
    %812 = vmatprep.subr.mxu0 0.0
    %813 = vmatpush1.msra.mxu0 0.0
    %814 = vmatprep.subr.mxu0 0.0
    %815 = vmatpush1.msra.mxu0 0.0
    %816 = vmatprep.subr.mxu0 0.0
    %817 = vmatpush1.msra.mxu0 0.0
    %818 = vmatprep.subr.mxu0 0.0
    %819 = vmatpush1.msra.mxu0 0.0
    %820 = vmatprep.subr.mxu0 0.0
    %821 = vmatpush1.msra.mxu0 0.0
    %822 = vmatprep.subr.mxu0 0.0
    %823 = vmatpush1.msra.mxu0 0.0
    %824 = vmatprep.subr.mxu0 0.0
    %825 = vmatpush1.msra.mxu0 0.0
    %826 = vmatprep.subr.mxu0 0.0
    %827 = vmatpush1.msra.mxu0 0.0
    %828 = vmatprep.mubr.f32.mxu0 0.0
    %829 = vmatmul.mubr.f32.gmra.mrb[0].mxu0 %v762
    %v830 = vpop.f32.mrb[0].mxu0
    %v831 = vadd.f32 0.0, %v830
    %v832 = vpop.f32.mrb[0].mxu0
    %833 = vdwg.mxu0
    %v834 = vadd.f32 %v763, %v831
    %v835 = vtanh.pop %v834
    %v836 = vld [vmem:[%s343] sm:$0xff]
    %837 = vmatprep.subr.mxu0 0.0
    %838 = vmatpush1.msra.mxu0 %v380
    %839 = vmatprep.subr.mxu0 0.0
    %840 = vmatpush1.msra.mxu0 %v381
    %841 = vmatprep.subr.mxu0 0.0
    %842 = vmatpush1.msra.mxu0 %v382
    %843 = vmatprep.subr.mxu0 0.0
    %844 = vmatpush1.msra.mxu0 %v383
    %845 = vmatprep.subr.mxu0 0.0
    %846 = vmatpush1.msra.mxu0 %v384
    %847 = vmatprep.subr.mxu0 0.0
    %848 = vmatpush1.msra.mxu0 %v385
    %849 = vmatprep.subr.mxu0 0.0
    %850 = vmatpush1.msra.mxu0 %v386
    %851 = vmatprep.subr.mxu0 0.0
    %852 = vmatpush1.msra.mxu0 %v387
    %853 = vmatprep.subr.mxu0 0.0
    %854 = vmatpush1.msra.mxu0 %v388
    %855 = vmatprep.subr.mxu0 0.0
    %856 = vmatpush1.msra.mxu0 %v389
    %857 = vmatprep.subr.mxu0 0.0
    %858 = vmatpush1.msra.mxu0 %v390
    %859 = vmatprep.subr.mxu0 0.0
    %860 = vmatpush1.msra.mxu0 %v391
    %861 = vmatprep.subr.mxu0 0.0
    %862 = vmatpush1.msra.mxu0 %v392
    %863 = vmatprep.subr.mxu0 0.0
    %864 = vmatpush1.msra.mxu0 %v393
    %865 = vmatprep.subr.mxu0 0.0
    %866 = vmatpush1.msra.mxu0 %v394
    %867 = vmatprep.subr.mxu0 0.0
    %868 = vmatpush1.msra.mxu0 %v395
    %869 = vmatprep.subr.mxu0 0.0
    %870 = vmatpush1.msra.mxu0 0.0
    %871 = vmatprep.subr.mxu0 0.0
    %872 = vmatpush1.msra.mxu0 0.0
    %873 = vmatprep.subr.mxu0 0.0
    %874 = vmatpush1.msra.mxu0 0.0
    %875 = vmatprep.subr.mxu0 0.0
    %876 = vmatpush1.msra.mxu0 0.0
    %877 = vmatprep.subr.mxu0 0.0
    %878 = vmatpush1.msra.mxu0 0.0
    %879 = vmatprep.subr.mxu0 0.0
    %880 = vmatpush1.msra.mxu0 0.0
    %881 = vmatprep.subr.mxu0 0.0
    %882 = vmatpush1.msra.mxu0 0.0
    %883 = vmatprep.subr.mxu0 0.0
    %884 = vmatpush1.msra.mxu0 0.0
    %885 = vmatprep.subr.mxu0 0.0
    %886 = vmatpush1.msra.mxu0 0.0
    %887 = vmatprep.subr.mxu0 0.0
    %888 = vmatpush1.msra.mxu0 0.0
    %889 = vmatprep.subr.mxu0 0.0
    %890 = vmatpush1.msra.mxu0 0.0
    %891 = vmatprep.subr.mxu0 0.0
    %892 = vmatpush1.msra.mxu0 0.0
    %893 = vmatprep.subr.mxu0 0.0
    %894 = vmatpush1.msra.mxu0 0.0
    %895 = vmatprep.subr.mxu0 0.0
    %896 = vmatpush1.msra.mxu0 0.0
    %897 = vmatprep.subr.mxu0 0.0
    %898 = vmatpush1.msra.mxu0 0.0
    %899 = vmatprep.subr.mxu0 0.0
    %900 = vmatpush1.msra.mxu0 0.0
    %901 = vmatprep.mubr.f32.mxu0 0.0
    %902 = vmatmul.mubr.f32.gmra.mrb[0].mxu0 %v835
    %v903 = vpop.f32.mrb[0].mxu0
    %v904 = vadd.f32 0.0, %v903
    %v905 = vpop.f32.mrb[0].mxu0
    %906 = vdwg.mxu0
    %v907 = vadd.f32 %v836, %v904
    %v908 = vtanh.pop %v907
    %909 = vst [vmem:[#allocation10] sm:$0xff] %v908
    // Predicated region
    $region18: #{tpu_custom_call.1} parent=1 // pred_check
      _
    $region19: #{tpu_custom_call.1} parent=1 // pred_check_branch
      %911 = sbr.rel (0) target = $region21
    $region20: #{tpu_custom_call.1} parent=1 // pred_region
      %s913 = ssub.s32 128, 128
      %914 = vsyncadd [#allocation7], %s913
      %s916 = sshll.u32 [#allocation10], 4
      %s917 = int_to_ptr.vmem [resolvable:$true] %s916
      %919 = dma.vmem_to_hbm [thread:$0]  %s917, 128, %s3, [#allocation7]
    $region21: #{tpu_custom_call.1} parent=1 // pred_fallthru
      _
    // Predicated region
    $region22: #{tpu_custom_call.1} parent=1 // pred_check
      _
    $region23: #{tpu_custom_call.1} parent=1 // pred_check_branch
      %921 = sbr.rel (0) target = $region25
    $region24: #{tpu_custom_call.1} parent=1 // pred_region
      %922 = dma.done [#allocation7], 128
    $region25: #{tpu_custom_call.1} parent=1 // pred_fallthru
      _
    %923 = vsyncpa [#allocation6], 1
    %924 = vsyncpa [#allocation9], 1
    %925 = vsyncpa [#allocation7], 1

</llo_original>
